<compile_context>
chip_gen: v6e
topology: v6e:2x2x1
jax: 0.10.0
libtpu: 0.0.40
codegen_flags: <defaults>
</compile_context>

<pallas_src>
import functools

import jax
import jax.numpy as jnp
from jax.experimental import pallas as pl
from jax.experimental.pallas import tpu as pltpu

GROUPS = 32
BASE_WIDTH = 4
BN_EPS = 1e-5

# GEMM tile sizes (bf16 A/B, f32 accumulator): ~4 MiB per-step footprint, fits
# comfortably under VMEM on v5e (128 MiB), v6e (128 MiB) and v7x (64 MiB).
TM, TN, TK = 512, 256, 512


def _round_up(x, m):
    return ((x + m - 1) // m) * m


def _mosaic_params(dims, tile_bytes):
    # vmem limit derived from the per-step tile footprint (double buffers already
    # counted in tile_bytes) with headroom; capped below v7x's 64 MiB of VMEM.
    limit = int(min(64 * 1024 * 1024, max(32 * 1024 * 1024, 2 * tile_bytes)))
    return pltpu.CompilerParams(dimension_semantics=dims, vmem_limit_bytes=limit)


# ----------------------------------------------------------------------------
# Pallas kernels
# ----------------------------------------------------------------------------
def _gemm_fused_kernel(relu, has_res, a_ref, b_ref, scale_ref, shift_ref, *rest):
    # a: (tm, tk) bf16, b: (tk, tn) bf16, scale/shift: (1, tn) f32,
    # [res: (tm, tn) f32,] out: (tm, tn) f32, acc scratch: (tm, tn) f32.
    if has_res:
        res_ref, o_ref, acc_ref = rest
    else:
        o_ref, acc_ref = rest
    k = pl.program_id(2)

    @pl.when(k == 0)
    def _():
        acc_ref[...] = jnp.zeros_like(acc_ref)

    acc_ref[...] += jnp.dot(a_ref[...], b_ref[...],
                            preferred_element_type=jnp.float32)

    @pl.when(k == pl.num_programs(2) - 1)
    def _():
        y = acc_ref[...] * scale_ref[...] + shift_ref[...]
        if has_res:
            y = y + res_ref[...]
        if relu:
            y = jnp.maximum(y, 0.0)
        o_ref[...] = y.astype(o_ref.dtype)


@functools.partial(jax.jit, static_argnames=("relu",))
def fused_gemm(a, b, scale, shift, res=None, *, relu):
    """out = act((a @ b) * scale + shift [+ res]); bf16 MXU inputs, f32 epilogue."""
    M, K = a.shape
    Nc = b.shape[1]
    has_res = res is not None

    tm = min(TM, _round_up(M, 16))
    tn = min(TN, _round_up(Nc, 128))
    tk = min(TK, _round_up(K, 128))
    Mp, Np, Kp = _round_up(M, tm), _round_up(Nc, tn), _round_up(K, tk)

    a_p = jnp.pad(a.astype(jnp.bfloat16), ((0, Mp - M), (0, Kp - K)))
    b_p = jnp.pad(b.astype(jnp.bfloat16), ((0, Kp - K), (0, Np - Nc)))
    scale_p = jnp.pad(scale.reshape(1, Nc).astype(jnp.float32),
                      ((0, 0), (0, Np - Nc)))
    shift_p = jnp.pad(shift.reshape(1, Nc).astype(jnp.float32),
                      ((0, 0), (0, Np - Nc)))

    operands = [a_p, b_p, scale_p, shift_p]
    in_specs = [
        pl.BlockSpec((tm, tk), lambda i, j, k: (i, k)),
        pl.BlockSpec((tk, tn), lambda i, j, k: (k, j)),
        # K-invariant blocks: loaded once per (i, j) tile, not per K step.
        pl.BlockSpec((1, tn), lambda i, j, k: (0, j)),
        pl.BlockSpec((1, tn), lambda i, j, k: (0, j)),
    ]
    if has_res:
        res_p = jnp.pad(res.astype(jnp.float32), ((0, Mp - M), (0, Np - Nc)))
        operands.append(res_p)
        in_specs.append(pl.BlockSpec((tm, tn), lambda i, j, k: (i, j)))

    tile_bytes = (2 * (tm * tk * 2 + tk * tn * 2 + 2 * tn * 4 + tm * tn * 4
                       + (tm * tn * 4 if has_res else 0))
                  + tm * tn * 4)

    out = pl.pallas_call(
        functools.partial(_gemm_fused_kernel, relu, has_res),
        out_shape=jax.ShapeDtypeStruct((Mp, Np), jnp.float32),
        grid=(Mp // tm, Np // tn, Kp // tk),
        in_specs=in_specs,
        out_specs=pl.BlockSpec((tm, tn), lambda i, j, k: (i, j)),
        scratch_shapes=[pltpu.VMEM((tm, tn), jnp.float32)],
        compiler_params=_mosaic_params(("parallel", "parallel", "arbitrary"),
                                       tile_bytes),
    )(*operands)
    return out[:M, :Nc]


def _window_max_kernel(x_ref, o_ref):
    o_ref[...] = jnp.max(x_ref[...], axis=1)


@jax.jit
def window_max(p):  # (P, KK, C) -> (P, C)
    P, KK, C = p.shape
    tp_cap = max(8, ((2 * 1024 * 1024) // (KK * C * 4)) // 8 * 8)
    tp = min(tp_cap, _round_up(P, 8))
    Pp = _round_up(P, tp)
    p_pad = jnp.pad(p, ((0, Pp - P), (0, 0), (0, 0)))
    tile_bytes = 2 * (tp * KK * C * 4 + tp * C * 4)
    out = pl.pallas_call(
        _window_max_kernel,
        out_shape=jax.ShapeDtypeStruct((Pp, C), jnp.float32),
        grid=(Pp // tp,),
        in_specs=[pl.BlockSpec((tp, KK, C), lambda i: (i, 0, 0))],
        out_specs=pl.BlockSpec((tp, C), lambda i: (i, 0)),
        compiler_params=_mosaic_params(("parallel",), tile_bytes),
    )(p_pad)
    return out[:P]


def _spatial_mean_kernel(inv_hw, x_ref, o_ref, acc_ref):
    h = pl.program_id(0)

    @pl.when(h == 0)
    def _():
        acc_ref[...] = jnp.zeros_like(acc_ref)

    acc_ref[...] += jnp.sum(x_ref[...], axis=1)

    @pl.when(h == pl.num_programs(0) - 1)
    def _():
        o_ref[...] = acc_ref[...] * inv_hw


@jax.jit
def spatial_mean(x):  # (N, HW, C) -> (N, C)
    N, HW, C = x.shape
    th_cap = max(8, ((2 * 1024 * 1024) // (N * C * 4)) // 8 * 8)
    th = min(th_cap, _round_up(HW, 8))
    HWp = _round_up(HW, th)
    x_pad = jnp.pad(x, ((0, 0), (0, HWp - HW), (0, 0)))  # zero pad: sum unaffected
    tile_bytes = 2 * (N * th * C * 4 + N * C * 4) + N * C * 4
    out = pl.pallas_call(
        functools.partial(_spatial_mean_kernel, 1.0 / HW),
        out_shape=jax.ShapeDtypeStruct((N, C), jnp.float32),
        grid=(HWp // th,),
        in_specs=[pl.BlockSpec((N, th, C), lambda h: (0, h, 0))],
        out_specs=pl.BlockSpec((N, C), lambda h: (0, 0)),
        scratch_shapes=[pltpu.VMEM((N, C), jnp.float32)],
        compiler_params=_mosaic_params(("arbitrary",), tile_bytes),
    )(x_pad)
    return out


# ----------------------------------------------------------------------------
# Glue: im2col, conv / pool / transposed-conv wrappers (layout: NHWC)
# ----------------------------------------------------------------------------
def _extract_patches(x, kh, kw, stride, padding, pad_value=0.0):
    N, H, W, C = x.shape
    xp = jnp.pad(
        x, ((0, 0), (padding, padding), (padding, padding), (0, 0)),
        constant_values=pad_value,
    )
    Hp, Wp = H + 2 * padding, W + 2 * padding
    Ho = (Hp - kh) // stride + 1
    Wo = (Wp - kw) // stride + 1
    cols = []
    for di in range(kh):
        for dj in range(kw):
            cols.append(
                xp[:, di:di + stride * (Ho - 1) + 1:stride,
                      dj:dj + stride * (Wo - 1) + 1:stride, :]
            )
    patches = jnp.stack(cols, axis=3)  # (N, Ho, Wo, kh*kw, C)
    return patches, Ho, Wo


def _grouped_to_dense(w, groups):
    """(Cout, Cin/g, kh, kw) grouped weight -> block-diagonal dense (Cout, Cin, kh, kw)
    so the grouped conv runs as ONE lane-dense GEMM (N = width, not N = 4)."""
    Cout, Cin_g, kh, kw = w.shape
    Cout_g = Cout // groups
    w_g = w.reshape(groups, Cout_g, Cin_g, kh, kw)
    eye = jnp.eye(groups, dtype=w.dtype)
    dense = jnp.einsum('goikl,gh->gohikl', w_g, eye)
    return dense.reshape(Cout, groups * Cin_g, kh, kw)


def conv2d(x, conv_p, *, stride=1, padding=0, groups=1, bn=None, relu=False,
           residual=None):
    """Conv2d (PyTorch weight layout (Cout, Cin/g, kh, kw)) + optional BN + add + ReLU."""
    w = conv_p["w"]
    bias = conv_p.get("b")
    if groups > 1:
        w = _grouped_to_dense(w, groups)
    N, H, W, C = x.shape
    Cout, Cin, kh, kw = w.shape
    KK = kh * kw

    if kh == 1 and kw == 1 and padding == 0:
        xs = x[:, ::stride, ::stride, :]
        Ho, Wo = xs.shape[1], xs.shape[2]
        a = xs.reshape(N * Ho * Wo, C)
    else:
        # TODO(synk): im2col still materializes the (N,Ho,Wo,KK,C) patch tensor in
        # HBM; a direct halo'd conv kernel would remove the kh*kw read blowup.
        patches, Ho, Wo = _extract_patches(x, kh, kw, stride, padding)
        a = patches.reshape(N * Ho * Wo, KK * C)
    M = N * Ho * Wo
    b = w.transpose(2, 3, 1, 0).reshape(KK * Cin, Cout)

    if bn is not None:  # fold eval-mode BN (+ conv bias) into scale/shift
        s = bn["gamma"] / jnp.sqrt(bn["var"] + BN_EPS)
        sh = bn["beta"] - bn["mean"] * s
        if bias is not None:
            sh = sh + bias * s
    else:
        s = jnp.ones((Cout,), jnp.float32)
        sh = bias if bias is not None else jnp.zeros((Cout,), jnp.float32)

    res = residual.reshape(M, Cout) if residual is not None else None
    out = fused_gemm(a, b, s, sh, res, relu=relu)  # (M, Cout) f32
    return out.reshape(N, Ho, Wo, Cout)


def maxpool_3x3_s2_p1(x):
    N, H, W, C = x.shape
    patches, Ho, Wo = _extract_patches(x, 3, 3, 2, 1, pad_value=-jnp.inf)
    p = patches.reshape(N * Ho * Wo, 9, C)
    return window_max(p).reshape(N, Ho, Wo, C)


def global_avg_pool(x):  # AdaptiveAvgPool2d((1,1))
    N, H, W, C = x.shape
    return spatial_mean(x.reshape(N, H * W, C)).reshape(N, 1, 1, C)


def conv_transpose_2x2(x, p):
    """ConvTranspose2d(kernel=2, stride=2): 4 matmuls fused into one GEMM + interleave."""
    w, bias = p["w"], p["b"]  # w: (Cin, Cout, 2, 2)
    N, H, W, Cin = x.shape
    Cout = w.shape[1]
    a = x.reshape(N * H * W, Cin)
    b = w.transpose(0, 2, 3, 1).reshape(Cin, 4 * Cout)
    scale = jnp.ones((4 * Cout,), jnp.float32)
    shift = jnp.tile(bias, 4)
    out = fused_gemm(a, b, scale, shift, None, relu=False)
    out = (out.reshape(N, H, W, 2, 2, Cout)
              .transpose(0, 1, 3, 2, 4, 5)
              .reshape(N, 2 * H, 2 * W, Cout))
    return out


# ----------------------------------------------------------------------------
# Deterministic parameter construction
# ----------------------------------------------------------------------------
class ParamGen:
    def __init__(self, seed=0):
        self._key = jax.random.PRNGKey(seed)

    def _next(self):
        self._key, k = jax.random.split(self._key)
        return k

    def conv(self, cout, cin_g, kh, kw, bias=True):
        fan_in = cin_g * kh * kw
        std = (1.0 / fan_in) ** 0.5
        p = {"w": std * jax.random.normal(self._next(), (cout, cin_g, kh, kw), jnp.float32)}
        p["b"] = (0.01 * jax.random.normal(self._next(), (cout,), jnp.float32)
                  if bias else None)
        return p

    def convT(self, cin, cout, kh, kw):
        fan_in = cin * kh * kw
        std = (1.0 / fan_in) ** 0.5
        return {"w": std * jax.random.normal(self._next(), (cin, cout, kh, kw), jnp.float32),
                "b": 0.01 * jax.random.normal(self._next(), (cout,), jnp.float32)}

    def bn(self, c):  # PyTorch-default BN init, eval-mode running stats
        return {"gamma": jnp.ones((c,), jnp.float32),
                "beta": jnp.zeros((c,), jnp.float32),
                "mean": jnp.zeros((c,), jnp.float32),
                "var": jnp.ones((c,), jnp.float32)}


def make_double_conv(pg, cin, cout):
    return {"conv1": pg.conv(cout, cin, 3, 3), "bn1": pg.bn(cout),
            "conv2": pg.conv(cout, cout, 3, 3), "bn2": pg.bn(cout)}


def make_bottleneck(pg, inplanes, planes, stride):
    width = int(planes * (BASE_WIDTH / 64.0)) * GROUPS
    out_ch = planes * 4
    blk = {"conv1": pg.conv(width, inplanes, 1, 1, bias=False), "bn1": pg.bn(width),
           "conv2": pg.conv(width, width // GROUPS, 3, 3, bias=False), "bn2": pg.bn(width),
           "conv3": pg.conv(out_ch, width, 1, 1, bias=False), "bn3": pg.bn(out_ch),
           "stride": stride}
    if stride != 1 or inplanes != out_ch:
        blk["down_conv"] = pg.conv(out_ch, inplanes, 1, 1, bias=False)
        blk["down_bn"] = pg.bn(out_ch)
    return blk, out_ch


def make_resnext_layer(pg, inplanes, planes, blocks, stride):
    layer = []
    for i in range(blocks):
        blk, inplanes = make_bottleneck(pg, inplanes, planes, stride if i == 0 else 1)
        layer.append(blk)
    return layer, inplanes


def make_down(pg, cin, cout):
    # resnext50_32x4d backbone with conv1 replaced by Conv2d(cin, 64, 7, 2, 3, bias=False)
    p = {"conv1": pg.conv(64, cin, 7, 7, bias=False), "bn1": pg.bn(64)}
    inpl = 64
    layers = []
    for planes, blocks, stride in ((64, 3, 1), (128, 4, 2), (256, 6, 2), (512, 3, 2)):
        layer, inpl = make_resnext_layer(pg, inpl, planes, blocks, stride)
        layers.append(layer)
    p["layers"] = layers
    p["conv1x1"] = pg.conv(cout, 2048, 1, 1, bias=True)
    return p


def make_up(pg, cin_runtime, skip_ch, cout):
    return {"up": pg.convT(cin_runtime, cout, 2, 2),
            "conv": make_double_conv(pg, skip_ch + cout, cout)}


def make_unet(pg, in_channels, out_channels):
    return {"inc": make_double_conv(pg, in_channels, 64),
            "down1": make_down(pg, 64, 128),
            "down2": make_down(pg, 128, 256),
            "down3": make_down(pg, 256, 512),
            "down4": make_down(pg, 512, 512),
            "up1": make_up(pg, 512, 512, 256),
            "up2": make_up(pg, 256, 256, 128),
            "up3": make_up(pg, 128, 128, 64),
            "outc": pg.conv(out_channels, 64, 1, 1, bias=True)}


# ----------------------------------------------------------------------------
# Forward passes
# ----------------------------------------------------------------------------
def double_conv_forward(p, x):
    x = conv2d(x, p["conv1"], padding=1, bn=p["bn1"], relu=True)
    x = conv2d(x, p["conv2"], padding=1, bn=p["bn2"], relu=True)
    return x


def bottleneck_forward(p, x):
    stride = p["stride"]
    out = conv2d(x, p["conv1"], bn=p["bn1"], relu=True)
    out = conv2d(out, p["conv2"], stride=stride, padding=1, groups=GROUPS,
                 bn=p["bn2"], relu=True)
    if "down_conv" in p:
        identity = conv2d(x, p["down_conv"], stride=stride, bn=p["down_bn"], relu=False)
    else:
        identity = x
    # conv3 + bn3 + residual add + relu, all fused in the Pallas GEMM epilogue
    out = conv2d(out, p["conv3"], bn=p["bn3"], relu=True, residual=identity)
    return out


def down_forward(p, x):
    x = conv2d(x, p["conv1"], stride=2, padding=3, bn=p["bn1"], relu=True)
    x = maxpool_3x3_s2_p1(x)
    for layer in p["layers"]:
        for blk in layer:
            x = bottleneck_forward(blk, x)
    x = global_avg_pool(x)
    x = conv2d(x, p["conv1x1"], relu=False)
    return x


def up_forward(p, x1, x2):
    x1 = conv_transpose_2x2(x1, p["up"])
    # broadcast the 1x1 skip to x1's spatial size so torch.cat-equivalent works
    x2 = jnp.broadcast_to(x2, (x2.shape[0], x1.shape[1], x1.shape[2], x2.shape[3]))
    x = jnp.concatenate([x2, x1], axis=-1)  # channel concat (== torch.cat dim=1)
    return double_conv_forward(p["conv"], x)


def unet_forward(params, x_nchw):
    # layout: NCHW in / NCHW out at the boundary; NHWC internally.
    x = jnp.transpose(x_nchw, (0, 2, 3, 1)).astype(jnp.float32)
    x1 = double_conv_forward(params["inc"], x)
    x2 = down_forward(params["down1"], x1)
    x3 = down_forward(params["down2"], x2)
    x4 = down_forward(params["down3"], x3)
    x5 = down_forward(params["down4"], x4)
    u = up_forward(params["up1"], x5, x4)
    u = up_forward(params["up2"], u, x3)
    u = up_forward(params["up3"], u, x2)
    out = conv2d(u, params["outc"], relu=False)
    return jnp.transpose(out, (0, 3, 1, 2))


if __name__ == "__main__":
    pg = ParamGen(seed=0)
    params = make_unet(pg, in_channels=4, out_channels=3)
    x = jax.random.normal(jax.random.PRNGKey(0), (2, 4, 16, 16), jnp.float32)
    y = unet_forward(params, x)
    y = jax.block_until_ready(y)
    assert y.shape == (2, 3, 8, 8), y.shape
    assert bool(jnp.all(jnp.isfinite(y)))
    print("KERNEL_OK")
</pallas_src>

<mosaic_0001>
module attributes {stable_mosaic.version = 11 : i64} {
  func.func @_gemm_fused_kernel(%arg0: i32, %arg1: i32, %arg2: i32, %arg3: memref<512x128xbf16, #tpu.memory_space<vmem>>, %arg4: memref<128x128xbf16, #tpu.memory_space<vmem>>, %arg5: memref<1x128xf32, #tpu.memory_space<vmem>>, %arg6: memref<1x128xf32, #tpu.memory_space<vmem>>, %arg7: memref<512x128xf32, #tpu.memory_space<vmem>>, %arg8: memref<512x128xf32, #tpu.memory_space<vmem>>) attributes {dimension_semantics = [#tpu.dimension_semantics<parallel>, #tpu.dimension_semantics<parallel>, #tpu.dimension_semantics<arbitrary>], iteration_bounds = array<i64: 1, 1, 1>, scalar_prefetch = 0 : i64, scratch_operands = 1 : i64, tpu.core_type = #tpu.core_type<tc>, window_params = [{transform_indices = @transform_0, window_bounds = array<i64: 512, 128>}, {transform_indices = @transform_1, window_bounds = array<i64: 128, 128>}, {transform_indices = @transform_2, window_bounds = array<i64: 1, 128>}, {transform_indices = @transform_3, window_bounds = array<i64: 1, 128>}, {transform_indices = @transform_4, window_bounds = array<i64: 512, 128>}]} {
    %c0_i32 = arith.constant 0 : i32
    %0 = arith.cmpi eq, %arg2, %c0_i32 : i32
    %1 = arith.extui %0 : i1 to i32
    %c0_i32_0 = arith.constant 0 : i32
    %2 = arith.cmpi ne, %1, %c0_i32_0 : i32
    scf.if %2 {
      %cst_10 = arith.constant 0.000000e+00 : f32
      %12 = vector.broadcast %cst_10 : f32 to vector<512x128xf32>
      %c0_11 = arith.constant 0 : index
      %c0_12 = arith.constant 0 : index
      %13 = vector.load %arg8[%c0_11, %c0_12] : memref<512x128xf32, #tpu.memory_space<vmem>>, vector<512x128xf32>
      tpu.vector_store %arg8[%c0_11, %c0_12], %12 {strides = array<i32>} : memref<512x128xf32, #tpu.memory_space<vmem>>, vector<512x128xf32>,
    } else {
    }
    %c0 = arith.constant 0 : index
    %c0_1 = arith.constant 0 : index
    %3 = vector.load %arg8[%c0, %c0_1] : memref<512x128xf32, #tpu.memory_space<vmem>>, vector<512x128xf32>
    %c0_2 = arith.constant 0 : index
    %c0_3 = arith.constant 0 : index
    %4 = vector.load %arg3[%c0_2, %c0_3] : memref<512x128xbf16, #tpu.memory_space<vmem>>, vector<512x128xbf16>
    %c0_4 = arith.constant 0 : index
    %c0_5 = arith.constant 0 : index
    %5 = vector.load %arg4[%c0_4, %c0_5] : memref<128x128xbf16, #tpu.memory_space<vmem>>, vector<128x128xbf16>
    %cst = arith.constant dense<0.000000e+00> : vector<512x128xf32>
    %6 = tpu.matmul %4, %5, %cst {dimension_numbers = #tpu.dot_dimension_numbers<[1], [0], [0], [1], [0, 0, 1, 1], [], []>} : vector<512x128xbf16>, vector<128x128xbf16>, vector<512x128xf32> -> vector<512x128xf32>
    %7 = arith.addf %3, %6 : vector<512x128xf32>
    %c0_6 = arith.constant 0 : index
    %c0_7 = arith.constant 0 : index
    %8 = vector.load %arg8[%c0_6, %c0_7] : memref<512x128xf32, #tpu.memory_space<vmem>>, vector<512x128xf32>
    tpu.vector_store %arg8[%c0_6, %c0_7], %7 {strides = array<i32>} : memref<512x128xf32, #tpu.memory_space<vmem>>, vector<512x128xf32>,
    %c0_i32_8 = arith.constant 0 : i32
    %9 = arith.cmpi eq, %arg2, %c0_i32_8 : i32
    %10 = arith.extui %9 : i1 to i32
    %c0_i32_9 = arith.constant 0 : i32
    %11 = arith.cmpi ne, %10, %c0_i32_9 : i32
    scf.if %11 {
      %c0_10 = arith.constant 0 : index
      %c0_11 = arith.constant 0 : index
      %12 = vector.load %arg8[%c0_10, %c0_11] : memref<512x128xf32, #tpu.memory_space<vmem>>, vector<512x128xf32>
      %c0_12 = arith.constant 0 : index
      %c0_13 = arith.constant 0 : index
      %13 = vector.load %arg5[%c0_12, %c0_13] : memref<1x128xf32, #tpu.memory_space<vmem>>, vector<1x128xf32>
      %14 = vector.broadcast %13 : vector<1x128xf32> to vector<512x128xf32>
      %15 = arith.mulf %12, %14 : vector<512x128xf32>
      %c0_14 = arith.constant 0 : index
      %c0_15 = arith.constant 0 : index
      %16 = vector.load %arg6[%c0_14, %c0_15] : memref<1x128xf32, #tpu.memory_space<vmem>>, vector<1x128xf32>
      %17 = vector.broadcast %16 : vector<1x128xf32> to vector<512x128xf32>
      %18 = arith.addf %15, %17 : vector<512x128xf32>
      %cst_16 = arith.constant 0.000000e+00 : f32
      %19 = vector.broadcast %cst_16 : f32 to vector<512x128xf32>
      %20 = arith.maximumf %18, %19 : vector<512x128xf32>
      %c0_17 = arith.constant 0 : index
      %c0_18 = arith.constant 0 : index
      %21 = vector.load %arg7[%c0_17, %c0_18] : memref<512x128xf32, #tpu.memory_space<vmem>>, vector<512x128xf32>
      tpu.vector_store %arg7[%c0_17, %c0_18], %20 {strides = array<i32>} : memref<512x128xf32, #tpu.memory_space<vmem>>, vector<512x128xf32>,
    } else {
    }
    return
  }
  func.func @transform_0(%arg0: i32, %arg1: i32, %arg2: i32) -> (i32, i32) {
    %c0_i32 = arith.constant 0 : i32
    return %arg0, %arg2 : i32, i32
  }
  func.func @transform_1(%arg0: i32, %arg1: i32, %arg2: i32) -> (i32, i32) {
    %c0_i32 = arith.constant 0 : i32
    return %arg2, %arg1 : i32, i32
  }
  func.func @transform_2(%arg0: i32, %arg1: i32, %arg2: i32) -> (i32, i32) {
    %c0_i32 = arith.constant 0 : i32
    %c0_i32_0 = arith.constant 0 : i32
    return %c0_i32, %arg1 : i32, i32
  }
  func.func @transform_3(%arg0: i32, %arg1: i32, %arg2: i32) -> (i32, i32) {
    %c0_i32 = arith.constant 0 : i32
    %c0_i32_0 = arith.constant 0 : i32
    return %c0_i32, %arg1 : i32, i32
  }
  func.func @transform_4(%arg0: i32, %arg1: i32, %arg2: i32) -> (i32, i32) {
    %c0_i32 = arith.constant 0 : i32
    return %arg0, %arg1 : i32, i32
  }
}

</mosaic_0001>

<llo_original>
// kernel: fused_gemm.1
$region0: #{fused_gemm.1}
  #allocation0 [shape = 'u32[]', space=smem, size = 0x4, offset = 0x4, fixed_abs, tag = 'smem constant byte address 0x4 - core index']
  #allocation1 [shape = 'u32[144,128]{1,0:T(1,128)}', space=vmem, size = 0x12000, scoped, tag = 'internal scratch']
  #allocation2 [shape = 'f32[512,128]{1,0:T(8,128)}', space=vmem, size = 0x40000, scoped, tag = 'scratch operand']
  %s0 = inlined_call_operand.vmem [shape: bf16[512,128], index: 0, kind: input, shape index: {}]
  %s1 = inlined_call_operand.vmem [shape: bf16[128,128], index: 1, kind: input, shape index: {}]
  %s2 = inlined_call_operand.vmem [shape: f32[1,128], index: 2, kind: input, shape index: {}]
  %s3 = inlined_call_operand.vmem [shape: f32[1,128], index: 3, kind: input, shape index: {}]
  %s4 = inlined_call_operand.vmem [shape: f32[512,128], index: 4, kind: output, shape index: {}]
  %s5 = sld [smem:[#allocation0]]
  $region34: #{fused_gemm.1} parent=0
    _
  %s7 = ssub.s32 1, %s5
  %s8 = scalar_select 0, %s7, %s5
  // Predicated region
  $region2: #{fused_gemm.1} parent=0 // pred_check
    _
  $region3: #{fused_gemm.1} parent=0 // pred_check_branch
    %10 = sbr.rel (0) target = $region5
  $region4: #{fused_gemm.1} parent=0 // pred_region
    _
  $region5: #{fused_gemm.1} parent=0 // pred_fallthru
    _
  // Predicated region
  $region6: #{fused_gemm.1} parent=0 // pred_check
    _
  $region7: #{fused_gemm.1} parent=0 // pred_check_branch
    %12 = sbr.rel (0) target = $region9
  $region8: #{fused_gemm.1} parent=0 // pred_region
    _
  $region9: #{fused_gemm.1} parent=0 // pred_fallthru
    _
  // Predicated region
  $region10: #{fused_gemm.1} parent=0 // pred_check
    _
  $region11: #{fused_gemm.1} parent=0 // pred_check_branch
    %14 = sbr.rel (0) target = $region13
  $region12: #{fused_gemm.1} parent=0 // pred_region
    _
  $region13: #{fused_gemm.1} parent=0 // pred_fallthru
    _
  // Predicated region
  $region14: #{fused_gemm.1} parent=0 // pred_check
    _
  $region15: #{fused_gemm.1} parent=0 // pred_check_branch
    %16 = sbr.rel (0) target = $region17
  $region16: #{fused_gemm.1} parent=0 // pred_region
    _
  $region17: #{fused_gemm.1} parent=0 // pred_fallthru
    _
  %p18 = scmp.eq.s32.totalorder 0, 0
  // Predicated region
  $region18: #{fused_gemm.1} parent=0 // pred_check
    %p19 = pneg %p18
  $region19: #{fused_gemm.1} parent=0 // pred_check_branch
    %21 = sbr.rel (%p19) target = $region21
  $region20: #{fused_gemm.1} parent=0 // pred_region
    %22 = vst [vmem:[#allocation2] sm:$0xff] 0.0
    %23 = vst [vmem:[#allocation2 + $0x8] sm:$0xff] 0.0
    %24 = vst [vmem:[#allocation2 + $0x10] sm:$0xff] 0.0
    %25 = vst [vmem:[#allocation2 + $0x18] sm:$0xff] 0.0
    %26 = vst [vmem:[#allocation2 + $0x20] sm:$0xff] 0.0
    %27 = vst [vmem:[#allocation2 + $0x28] sm:$0xff] 0.0
    %28 = vst [vmem:[#allocation2 + $0x30] sm:$0xff] 0.0
    %29 = vst [vmem:[#allocation2 + $0x38] sm:$0xff] 0.0
    %30 = vst [vmem:[#allocation2 + $0x40] sm:$0xff] 0.0
    %31 = vst [vmem:[#allocation2 + $0x48] sm:$0xff] 0.0
    %32 = vst [vmem:[#allocation2 + $0x50] sm:$0xff] 0.0
    %33 = vst [vmem:[#allocation2 + $0x58] sm:$0xff] 0.0
    %34 = vst [vmem:[#allocation2 + $0x60] sm:$0xff] 0.0
    %35 = vst [vmem:[#allocation2 + $0x68] sm:$0xff] 0.0
    %36 = vst [vmem:[#allocation2 + $0x70] sm:$0xff] 0.0
    %37 = vst [vmem:[#allocation2 + $0x78] sm:$0xff] 0.0
    %38 = vst [vmem:[#allocation2 + $0x80] sm:$0xff] 0.0
    %39 = vst [vmem:[#allocation2 + $0x88] sm:$0xff] 0.0
    %40 = vst [vmem:[#allocation2 + $0x90] sm:$0xff] 0.0
    %41 = vst [vmem:[#allocation2 + $0x98] sm:$0xff] 0.0
    %42 = vst [vmem:[#allocation2 + $0xa0] sm:$0xff] 0.0
    %43 = vst [vmem:[#allocation2 + $0xa8] sm:$0xff] 0.0
    %44 = vst [vmem:[#allocation2 + $0xb0] sm:$0xff] 0.0
    %45 = vst [vmem:[#allocation2 + $0xb8] sm:$0xff] 0.0
    %46 = vst [vmem:[#allocation2 + $0xc0] sm:$0xff] 0.0
    %47 = vst [vmem:[#allocation2 + $0xc8] sm:$0xff] 0.0
    %48 = vst [vmem:[#allocation2 + $0xd0] sm:$0xff] 0.0
    %49 = vst [vmem:[#allocation2 + $0xd8] sm:$0xff] 0.0
    %50 = vst [vmem:[#allocation2 + $0xe0] sm:$0xff] 0.0
    %51 = vst [vmem:[#allocation2 + $0xe8] sm:$0xff] 0.0
    %52 = vst [vmem:[#allocation2 + $0xf0] sm:$0xff] 0.0
    %53 = vst [vmem:[#allocation2 + $0xf8] sm:$0xff] 0.0
    %54 = vst [vmem:[#allocation2 + $0x100] sm:$0xff] 0.0
    %55 = vst [vmem:[#allocation2 + $0x108] sm:$0xff] 0.0
    %56 = vst [vmem:[#allocation2 + $0x110] sm:$0xff] 0.0
    %57 = vst [vmem:[#allocation2 + $0x118] sm:$0xff] 0.0
    %58 = vst [vmem:[#allocation2 + $0x120] sm:$0xff] 0.0
    %59 = vst [vmem:[#allocation2 + $0x128] sm:$0xff] 0.0
    %60 = vst [vmem:[#allocation2 + $0x130] sm:$0xff] 0.0
    %61 = vst [vmem:[#allocation2 + $0x138] sm:$0xff] 0.0
    %62 = vst [vmem:[#allocation2 + $0x140] sm:$0xff] 0.0
    %63 = vst [vmem:[#allocation2 + $0x148] sm:$0xff] 0.0
    %64 = vst [vmem:[#allocation2 + $0x150] sm:$0xff] 0.0
    %65 = vst [vmem:[#allocation2 + $0x158] sm:$0xff] 0.0
    %66 = vst [vmem:[#allocation2 + $0x160] sm:$0xff] 0.0
    %67 = vst [vmem:[#allocation2 + $0x168] sm:$0xff] 0.0
    %68 = vst [vmem:[#allocation2 + $0x170] sm:$0xff] 0.0
    %69 = vst [vmem:[#allocation2 + $0x178] sm:$0xff] 0.0
    %70 = vst [vmem:[#allocation2 + $0x180] sm:$0xff] 0.0
    %71 = vst [vmem:[#allocation2 + $0x188] sm:$0xff] 0.0
    %72 = vst [vmem:[#allocation2 + $0x190] sm:$0xff] 0.0
    %73 = vst [vmem:[#allocation2 + $0x198] sm:$0xff] 0.0
    %74 = vst [vmem:[#allocation2 + $0x1a0] sm:$0xff] 0.0
    %75 = vst [vmem:[#allocation2 + $0x1a8] sm:$0xff] 0.0
    %76 = vst [vmem:[#allocation2 + $0x1b0] sm:$0xff] 0.0
    %77 = vst [vmem:[#allocation2 + $0x1b8] sm:$0xff] 0.0
    %78 = vst [vmem:[#allocation2 + $0x1c0] sm:$0xff] 0.0
    %79 = vst [vmem:[#allocation2 + $0x1c8] sm:$0xff] 0.0
    %80 = vst [vmem:[#allocation2 + $0x1d0] sm:$0xff] 0.0
    %81 = vst [vmem:[#allocation2 + $0x1d8] sm:$0xff] 0.0
    %82 = vst [vmem:[#allocation2 + $0x1e0] sm:$0xff] 0.0
    %83 = vst [vmem:[#allocation2 + $0x1e8] sm:$0xff] 0.0
    %84 = vst [vmem:[#allocation2 + $0x1f0] sm:$0xff] 0.0
    %85 = vst [vmem:[#allocation2 + $0x1f8] sm:$0xff] 0.0
  $region21: #{fused_gemm.1} parent=0 // pred_fallthru
    _
  %v86 = vld [vmem:[#allocation2] sm:$0xff]
  %v87 = vld [vmem:[#allocation2 + $0x8] sm:$0xff]
  %v88 = vld [vmem:[#allocation2 + $0x10] sm:$0xff]
  %v89 = vld [vmem:[#allocation2 + $0x18] sm:$0xff]
  %v90 = vld [vmem:[#allocation2 + $0x20] sm:$0xff]
  %v91 = vld [vmem:[#allocation2 + $0x28] sm:$0xff]
  %v92 = vld [vmem:[#allocation2 + $0x30] sm:$0xff]
  %v93 = vld [vmem:[#allocation2 + $0x38] sm:$0xff]
  %v94 = vld [vmem:[#allocation2 + $0x40] sm:$0xff]
  %v95 = vld [vmem:[#allocation2 + $0x48] sm:$0xff]
  %v96 = vld [vmem:[#allocation2 + $0x50] sm:$0xff]
  %v97 = vld [vmem:[#allocation2 + $0x58] sm:$0xff]
  %v98 = vld [vmem:[#allocation2 + $0x60] sm:$0xff]
  %v99 = vld [vmem:[#allocation2 + $0x68] sm:$0xff]
  %v100 = vld [vmem:[#allocation2 + $0x70] sm:$0xff]
  %v101 = vld [vmem:[#allocation2 + $0x78] sm:$0xff]
  %v102 = vld [vmem:[#allocation2 + $0x80] sm:$0xff]
  %v103 = vld [vmem:[#allocation2 + $0x88] sm:$0xff]
  %v104 = vld [vmem:[#allocation2 + $0x90] sm:$0xff]
  %v105 = vld [vmem:[#allocation2 + $0x98] sm:$0xff]
  %v106 = vld [vmem:[#allocation2 + $0xa0] sm:$0xff]
  %v107 = vld [vmem:[#allocation2 + $0xa8] sm:$0xff]
  %v108 = vld [vmem:[#allocation2 + $0xb0] sm:$0xff]
  %v109 = vld [vmem:[#allocation2 + $0xb8] sm:$0xff]
  %v110 = vld [vmem:[#allocation2 + $0xc0] sm:$0xff]
  %v111 = vld [vmem:[#allocation2 + $0xc8] sm:$0xff]
  %v112 = vld [vmem:[#allocation2 + $0xd0] sm:$0xff]
  %v113 = vld [vmem:[#allocation2 + $0xd8] sm:$0xff]
  %v114 = vld [vmem:[#allocation2 + $0xe0] sm:$0xff]
  %v115 = vld [vmem:[#allocation2 + $0xe8] sm:$0xff]
  %v116 = vld [vmem:[#allocation2 + $0xf0] sm:$0xff]
  %v117 = vld [vmem:[#allocation2 + $0xf8] sm:$0xff]
  %v118 = vld [vmem:[#allocation2 + $0x100] sm:$0xff]
  %v119 = vld [vmem:[#allocation2 + $0x108] sm:$0xff]
  %v120 = vld [vmem:[#allocation2 + $0x110] sm:$0xff]
  %v121 = vld [vmem:[#allocation2 + $0x118] sm:$0xff]
  %v122 = vld [vmem:[#allocation2 + $0x120] sm:$0xff]
  %v123 = vld [vmem:[#allocation2 + $0x128] sm:$0xff]
  %v124 = vld [vmem:[#allocation2 + $0x130] sm:$0xff]
  %v125 = vld [vmem:[#allocation2 + $0x138] sm:$0xff]
  %v126 = vld [vmem:[#allocation2 + $0x140] sm:$0xff]
  %v127 = vld [vmem:[#allocation2 + $0x148] sm:$0xff]
  %v128 = vld [vmem:[#allocation2 + $0x150] sm:$0xff]
  %v129 = vld [vmem:[#allocation2 + $0x158] sm:$0xff]
  %v130 = vld [vmem:[#allocation2 + $0x160] sm:$0xff]
  %v131 = vld [vmem:[#allocation2 + $0x168] sm:$0xff]
  %v132 = vld [vmem:[#allocation2 + $0x170] sm:$0xff]
  %v133 = vld [vmem:[#allocation2 + $0x178] sm:$0xff]
  %v134 = vld [vmem:[#allocation2 + $0x180] sm:$0xff]
  %v135 = vld [vmem:[#allocation2 + $0x188] sm:$0xff]
  %v136 = vld [vmem:[#allocation2 + $0x190] sm:$0xff]
  %v137 = vld [vmem:[#allocation2 + $0x198] sm:$0xff]
  %v138 = vld [vmem:[#allocation2 + $0x1a0] sm:$0xff]
  %v139 = vld [vmem:[#allocation2 + $0x1a8] sm:$0xff]
  %v140 = vld [vmem:[#allocation2 + $0x1b0] sm:$0xff]
  %v141 = vld [vmem:[#allocation2 + $0x1b8] sm:$0xff]
  %v142 = vld [vmem:[#allocation2 + $0x1c0] sm:$0xff]
  %v143 = vld [vmem:[#allocation2 + $0x1c8] sm:$0xff]
  %v144 = vld [vmem:[#allocation2 + $0x1d0] sm:$0xff]
  %v145 = vld [vmem:[#allocation2 + $0x1d8] sm:$0xff]
  %v146 = vld [vmem:[#allocation2 + $0x1e0] sm:$0xff]
  %v147 = vld [vmem:[#allocation2 + $0x1e8] sm:$0xff]
  %v148 = vld [vmem:[#allocation2 + $0x1f0] sm:$0xff]
  %v149 = vld [vmem:[#allocation2 + $0x1f8] sm:$0xff]
  %v150 = vld [vmem:[%s0] sm:$0xf]
  %v151 = vld [vmem:[%s0 + $0x4] sm:$0xf]
  %v152 = vld [vmem:[%s0 + $0x8] sm:$0xf]
  %v153 = vld [vmem:[%s0 + $0xc] sm:$0xf]
  %v154 = vld [vmem:[%s0 + $0x10] sm:$0xf]
  %v155 = vld [vmem:[%s0 + $0x14] sm:$0xf]
  %v156 = vld [vmem:[%s0 + $0x18] sm:$0xf]
  %v157 = vld [vmem:[%s0 + $0x1c] sm:$0xf]
  %v158 = vld [vmem:[%s0 + $0x20] sm:$0xf]
  %v159 = vld [vmem:[%s0 + $0x24] sm:$0xf]
  %v160 = vld [vmem:[%s0 + $0x28] sm:$0xf]
  %v161 = vld [vmem:[%s0 + $0x2c] sm:$0xf]
  %v162 = vld [vmem:[%s0 + $0x30] sm:$0xf]
  %v163 = vld [vmem:[%s0 + $0x34] sm:$0xf]
  %v164 = vld [vmem:[%s0 + $0x38] sm:$0xf]
  %v165 = vld [vmem:[%s0 + $0x3c] sm:$0xf]
  %v166 = vld [vmem:[%s0 + $0x40] sm:$0xf]
  %v167 = vld [vmem:[%s0 + $0x44] sm:$0xf]
  %v168 = vld [vmem:[%s0 + $0x48] sm:$0xf]
  %v169 = vld [vmem:[%s0 + $0x4c] sm:$0xf]
  %v170 = vld [vmem:[%s0 + $0x50] sm:$0xf]
  %v171 = vld [vmem:[%s0 + $0x54] sm:$0xf]
  %v172 = vld [vmem:[%s0 + $0x58] sm:$0xf]
  %v173 = vld [vmem:[%s0 + $0x5c] sm:$0xf]
  %v174 = vld [vmem:[%s0 + $0x60] sm:$0xf]
  %v175 = vld [vmem:[%s0 + $0x64] sm:$0xf]
  %v176 = vld [vmem:[%s0 + $0x68] sm:$0xf]
  %v177 = vld [vmem:[%s0 + $0x6c] sm:$0xf]
  %v178 = vld [vmem:[%s0 + $0x70] sm:$0xf]
  %v179 = vld [vmem:[%s0 + $0x74] sm:$0xf]
  %v180 = vld [vmem:[%s0 + $0x78] sm:$0xf]
  %v181 = vld [vmem:[%s0 + $0x7c] sm:$0xf]
  %v182 = vld [vmem:[%s0 + $0x80] sm:$0xf]
  %v183 = vld [vmem:[%s0 + $0x84] sm:$0xf]
  %v184 = vld [vmem:[%s0 + $0x88] sm:$0xf]
  %v185 = vld [vmem:[%s0 + $0x8c] sm:$0xf]
  %v186 = vld [vmem:[%s0 + $0x90] sm:$0xf]
  %v187 = vld [vmem:[%s0 + $0x94] sm:$0xf]
  %v188 = vld [vmem:[%s0 + $0x98] sm:$0xf]
  %v189 = vld [vmem:[%s0 + $0x9c] sm:$0xf]
  %v190 = vld [vmem:[%s0 + $0xa0] sm:$0xf]
  %v191 = vld [vmem:[%s0 + $0xa4] sm:$0xf]
  %v192 = vld [vmem:[%s0 + $0xa8] sm:$0xf]
  %v193 = vld [vmem:[%s0 + $0xac] sm:$0xf]
  %v194 = vld [vmem:[%s0 + $0xb0] sm:$0xf]
  %v195 = vld [vmem:[%s0 + $0xb4] sm:$0xf]
  %v196 = vld [vmem:[%s0 + $0xb8] sm:$0xf]
  %v197 = vld [vmem:[%s0 + $0xbc] sm:$0xf]
  %v198 = vld [vmem:[%s0 + $0xc0] sm:$0xf]
  %v199 = vld [vmem:[%s0 + $0xc4] sm:$0xf]
  %v200 = vld [vmem:[%s0 + $0xc8] sm:$0xf]
  %v201 = vld [vmem:[%s0 + $0xcc] sm:$0xf]
  %v202 = vld [vmem:[%s0 + $0xd0] sm:$0xf]
  %v203 = vld [vmem:[%s0 + $0xd4] sm:$0xf]
  %v204 = vld [vmem:[%s0 + $0xd8] sm:$0xf]
  %v205 = vld [vmem:[%s0 + $0xdc] sm:$0xf]
  %v206 = vld [vmem:[%s0 + $0xe0] sm:$0xf]
  %v207 = vld [vmem:[%s0 + $0xe4] sm:$0xf]
  %v208 = vld [vmem:[%s0 + $0xe8] sm:$0xf]
  %v209 = vld [vmem:[%s0 + $0xec] sm:$0xf]
  %v210 = vld [vmem:[%s0 + $0xf0] sm:$0xf]
  %v211 = vld [vmem:[%s0 + $0xf4] sm:$0xf]
  %v212 = vld [vmem:[%s0 + $0xf8] sm:$0xf]
  %v213 = vld [vmem:[%s0 + $0xfc] sm:$0xf]
  %v214 = vld [vmem:[%s1] sm:$0xf]
  %v215 = vld [vmem:[%s1 + $0x4] sm:$0xf]
  %v216 = vld [vmem:[%s1 + $0x8] sm:$0xf]
  %v217 = vld [vmem:[%s1 + $0xc] sm:$0xf]
  %v218 = vld [vmem:[%s1 + $0x10] sm:$0xf]
  %v219 = vld [vmem:[%s1 + $0x14] sm:$0xf]
  %v220 = vld [vmem:[%s1 + $0x18] sm:$0xf]
  %v221 = vld [vmem:[%s1 + $0x1c] sm:$0xf]
  %v222 = vld [vmem:[%s1 + $0x20] sm:$0xf]
  %v223 = vld [vmem:[%s1 + $0x24] sm:$0xf]
  %v224 = vld [vmem:[%s1 + $0x28] sm:$0xf]
  %v225 = vld [vmem:[%s1 + $0x2c] sm:$0xf]
  %v226 = vld [vmem:[%s1 + $0x30] sm:$0xf]
  %v227 = vld [vmem:[%s1 + $0x34] sm:$0xf]
  %v228 = vld [vmem:[%s1 + $0x38] sm:$0xf]
  %v229 = vld [vmem:[%s1 + $0x3c] sm:$0xf]
  %v294 = vunpack.c.l.b16 %v150
  %v295 = vunpack.c.l.b16 %v151
  %v296 = vunpack.c.l.b16 %v152
  %v297 = vunpack.c.l.b16 %v153
  %v298 = vunpack.c.l.b16 %v154
  %v299 = vunpack.c.l.b16 %v155
  %v300 = vunpack.c.l.b16 %v156
  %v301 = vunpack.c.l.b16 %v157
  %v302 = vunpack.c.l.b16 %v158
  %v303 = vunpack.c.l.b16 %v159
  %v304 = vunpack.c.l.b16 %v160
  %v305 = vunpack.c.l.b16 %v161
  %v306 = vunpack.c.l.b16 %v162
  %v307 = vunpack.c.l.b16 %v163
  %v308 = vunpack.c.l.b16 %v164
  %v309 = vunpack.c.l.b16 %v165
  %v310 = vunpack.c.l.b16 %v166
  %v311 = vunpack.c.l.b16 %v167
  %v312 = vunpack.c.l.b16 %v168
  %v313 = vunpack.c.l.b16 %v169
  %v314 = vunpack.c.l.b16 %v170
  %v315 = vunpack.c.l.b16 %v171
  %v316 = vunpack.c.l.b16 %v172
  %v317 = vunpack.c.l.b16 %v173
  %v318 = vunpack.c.l.b16 %v174
  %v319 = vunpack.c.l.b16 %v175
  %v320 = vunpack.c.l.b16 %v176
  %v321 = vunpack.c.l.b16 %v177
  %v322 = vunpack.c.l.b16 %v178
  %v323 = vunpack.c.l.b16 %v179
  %v324 = vunpack.c.l.b16 %v180
  %v325 = vunpack.c.l.b16 %v181
  %v326 = vunpack.c.l.b16 %v182
  %v327 = vunpack.c.l.b16 %v183
  %v328 = vunpack.c.l.b16 %v184
  %v329 = vunpack.c.l.b16 %v185
  %v330 = vunpack.c.l.b16 %v186
  %v331 = vunpack.c.l.b16 %v187
  %v332 = vunpack.c.l.b16 %v188
  %v333 = vunpack.c.l.b16 %v189
  %v334 = vunpack.c.l.b16 %v190
  %v335 = vunpack.c.l.b16 %v191
  %v336 = vunpack.c.l.b16 %v192
  %v337 = vunpack.c.l.b16 %v193
  %v338 = vunpack.c.l.b16 %v194
  %v339 = vunpack.c.l.b16 %v195
  %v340 = vunpack.c.l.b16 %v196
  %v341 = vunpack.c.l.b16 %v197
  %v342 = vunpack.c.l.b16 %v198
  %v343 = vunpack.c.l.b16 %v199
  %v344 = vunpack.c.l.b16 %v200
  %v345 = vunpack.c.l.b16 %v201
  %v346 = vunpack.c.l.b16 %v202
  %v347 = vunpack.c.l.b16 %v203
  %v348 = vunpack.c.l.b16 %v204
  %v349 = vunpack.c.l.b16 %v205
  %v350 = vunpack.c.l.b16 %v206
  %v351 = vunpack.c.l.b16 %v207
  %v352 = vunpack.c.l.b16 %v208
  %v353 = vunpack.c.l.b16 %v209
  %v354 = vunpack.c.l.b16 %v210
  %v355 = vunpack.c.l.b16 %v211
  %v356 = vunpack.c.l.b16 %v212
  %v357 = vunpack.c.l.b16 %v213
  %v358 = vpack.c.b16 %v295, %v294
  %v359 = vpack.c.b16 %v297, %v296
  %v360 = vpack.c.b16 %v299, %v298
  %v361 = vpack.c.b16 %v301, %v300
  %v362 = vpack.c.b16 %v303, %v302
  %v363 = vpack.c.b16 %v305, %v304
  %v364 = vpack.c.b16 %v307, %v306
  %v365 = vpack.c.b16 %v309, %v308
  %v366 = vpack.c.b16 %v311, %v310
  %v367 = vpack.c.b16 %v313, %v312
  %v368 = vpack.c.b16 %v315, %v314
  %v369 = vpack.c.b16 %v317, %v316
  %v370 = vpack.c.b16 %v319, %v318
  %v371 = vpack.c.b16 %v321, %v320
  %v372 = vpack.c.b16 %v323, %v322
  %v373 = vpack.c.b16 %v325, %v324
  %v374 = vpack.c.b16 %v327, %v326
  %v375 = vpack.c.b16 %v329, %v328
  %v376 = vpack.c.b16 %v331, %v330
  %v377 = vpack.c.b16 %v333, %v332
  %v378 = vpack.c.b16 %v335, %v334
  %v379 = vpack.c.b16 %v337, %v336
  %v380 = vpack.c.b16 %v339, %v338
  %v381 = vpack.c.b16 %v341, %v340
  %v382 = vpack.c.b16 %v343, %v342
  %v383 = vpack.c.b16 %v345, %v344
  %v384 = vpack.c.b16 %v347, %v346
  %v385 = vpack.c.b16 %v349, %v348
  %v386 = vpack.c.b16 %v351, %v350
  %v387 = vpack.c.b16 %v353, %v352
  %v388 = vpack.c.b16 %v355, %v354
  %v389 = vpack.c.b16 %v357, %v356
  %v438 = vunpack.c.l.b16 %v214
  %v439 = vunpack.c.l.b16 %v215
  %v440 = vunpack.c.l.b16 %v216
  %v441 = vunpack.c.l.b16 %v217
  %v442 = vunpack.c.l.b16 %v218
  %v443 = vunpack.c.l.b16 %v219
  %v444 = vunpack.c.l.b16 %v220
  %v445 = vunpack.c.l.b16 %v221
  %v446 = vunpack.c.l.b16 %v222
  %v447 = vunpack.c.l.b16 %v223
  %v448 = vunpack.c.l.b16 %v224
  %v449 = vunpack.c.l.b16 %v225
  %v450 = vunpack.c.l.b16 %v226
  %v451 = vunpack.c.l.b16 %v227
  %v452 = vunpack.c.l.b16 %v228
  %v453 = vunpack.c.l.b16 %v229
  %v454 = vpack.c.b16 %v439, %v438
  %v455 = vpack.c.b16 %v441, %v440
  %v456 = vpack.c.b16 %v443, %v442
  %v457 = vpack.c.b16 %v445, %v444
  %v458 = vpack.c.b16 %v447, %v446
  %v459 = vpack.c.b16 %v449, %v448
  %v460 = vpack.c.b16 %v451, %v450
  %v461 = vpack.c.b16 %v453, %v452
  %470 = vmatprep.subr.bf16.mxu0 0
  %471 = vmatpush1.bf16.msra.mxu0 %v461
  %472 = vmatprep.subr.bf16.mxu0 0
  %473 = vmatpush1.bf16.msra.mxu0 %v460
  %474 = vmatprep.subr.bf16.mxu0 0
  %475 = vmatpush1.bf16.msra.mxu0 %v459
  %476 = vmatprep.subr.bf16.mxu0 0
  %477 = vmatpush1.bf16.msra.mxu0 %v458
  %478 = vmatprep.subr.bf16.mxu0 0
  %479 = vmatpush1.bf16.msra.mxu0 %v457
  %480 = vmatprep.subr.bf16.mxu0 0
  %481 = vmatpush1.bf16.msra.mxu0 %v456
  %482 = vmatprep.subr.bf16.mxu0 0
  %483 = vmatpush1.bf16.msra.mxu0 %v455
  %484 = vmatprep.subr.bf16.mxu0 0
  %485 = vmatpush1.bf16.msra.mxu0 %v454
  %486 = vmatprep.subr.bf16.mxu0 0
  %487 = vmatpush2.bf16.msra.mxu0 0
  %488 = vmatprep.subr.bf16.mxu0 0
  %489 = vmatpush2.bf16.msra.mxu0 0
  %490 = vmatprep.subr.bf16.mxu0 0
  %491 = vmatpush2.bf16.msra.mxu0 0
  %492 = vmatprep.subr.bf16.mxu0 0
  %493 = vmatpush2.bf16.msra.mxu0 0
  %494 = vmatprep.subr.bf16.mxu0 0
  %495 = vmatpush2.bf16.msra.mxu0 0
  %496 = vmatprep.subr.bf16.mxu0 0
  %497 = vmatpush2.bf16.msra.mxu0 0
  %498 = vmatprep.subr.bf16.mxu0 0
  %499 = vmatpush2.bf16.msra.mxu0 0
  %500 = vmatprep.subr.bf16.mxu0 0
  %501 = vmatpush2.bf16.msra.mxu0 0
  %502 = vmatprep.mubr.bf16.mxu0 0
  %503 = vmatmul.mubr.bf16.gmra.mxu0 %v358
  %v504 = vpop.f32.mrf.mxu0
  %v505 = vadd.f32 0.0, %v504
  %v506 = vpop.f32.mrf.mxu0
  %v507 = vpop.f32.mrf.mxu0
  %v508 = vadd.f32 0.0, %v507
  %v509 = vpop.f32.mrf.mxu0
  %510 = vmatprep.mubr.bf16.mxu0 0
  %511 = vmatmul.mubr.bf16.gmra.mxu0 %v359
  %v512 = vpop.f32.mrf.mxu0
  %v513 = vadd.f32 0.0, %v512
  %v514 = vpop.f32.mrf.mxu0
  %v515 = vpop.f32.mrf.mxu0
  %v516 = vadd.f32 0.0, %v515
  %v517 = vpop.f32.mrf.mxu0
  %518 = vmatprep.mubr.bf16.mxu0 0
  %519 = vmatmul.mubr.bf16.gmra.mxu0 %v360
  %v520 = vpop.f32.mrf.mxu0
  %v521 = vadd.f32 0.0, %v520
  %v522 = vpop.f32.mrf.mxu0
  %v523 = vpop.f32.mrf.mxu0
  %v524 = vadd.f32 0.0, %v523
  %v525 = vpop.f32.mrf.mxu0
  %526 = vmatprep.mubr.bf16.mxu0 0
  %527 = vmatmul.mubr.bf16.gmra.mxu0 %v361
  %v528 = vpop.f32.mrf.mxu0
  %v529 = vadd.f32 0.0, %v528
  %v530 = vpop.f32.mrf.mxu0
  %v531 = vpop.f32.mrf.mxu0
  %v532 = vadd.f32 0.0, %v531
  %v533 = vpop.f32.mrf.mxu0
  %534 = vmatprep.mubr.bf16.mxu0 0
  %535 = vmatmul.mubr.bf16.gmra.mxu0 %v362
  %v536 = vpop.f32.mrf.mxu0
  %v537 = vadd.f32 0.0, %v536
  %v538 = vpop.f32.mrf.mxu0
  %v539 = vpop.f32.mrf.mxu0
  %v540 = vadd.f32 0.0, %v539
  %v541 = vpop.f32.mrf.mxu0
  %542 = vmatprep.mubr.bf16.mxu0 0
  %543 = vmatmul.mubr.bf16.gmra.mxu0 %v363
  %v544 = vpop.f32.mrf.mxu0
  %v545 = vadd.f32 0.0, %v544
  %v546 = vpop.f32.mrf.mxu0
  %v547 = vpop.f32.mrf.mxu0
  %v548 = vadd.f32 0.0, %v547
  %v549 = vpop.f32.mrf.mxu0
  %550 = vmatprep.mubr.bf16.mxu0 0
  %551 = vmatmul.mubr.bf16.gmra.mxu0 %v364
  %v552 = vpop.f32.mrf.mxu0
  %v553 = vadd.f32 0.0, %v552
  %v554 = vpop.f32.mrf.mxu0
  %v555 = vpop.f32.mrf.mxu0
  %v556 = vadd.f32 0.0, %v555
  %v557 = vpop.f32.mrf.mxu0
  %558 = vmatprep.mubr.bf16.mxu0 0
  %559 = vmatmul.mubr.bf16.gmra.mxu0 %v365
  %v560 = vpop.f32.mrf.mxu0
  %v561 = vadd.f32 0.0, %v560
  %v562 = vpop.f32.mrf.mxu0
  %v563 = vpop.f32.mrf.mxu0
  %v564 = vadd.f32 0.0, %v563
  %v565 = vpop.f32.mrf.mxu0
  %566 = vmatprep.mubr.bf16.mxu0 0
  %567 = vmatmul.mubr.bf16.gmra.mxu0 %v366
  %v568 = vpop.f32.mrf.mxu0
  %v569 = vadd.f32 0.0, %v568
  %v570 = vpop.f32.mrf.mxu0
  %v571 = vpop.f32.mrf.mxu0
  %v572 = vadd.f32 0.0, %v571
  %v573 = vpop.f32.mrf.mxu0
  %574 = vmatprep.mubr.bf16.mxu0 0
  %575 = vmatmul.mubr.bf16.gmra.mxu0 %v367
  %v576 = vpop.f32.mrf.mxu0
  %v577 = vadd.f32 0.0, %v576
  %v578 = vpop.f32.mrf.mxu0
  %v579 = vpop.f32.mrf.mxu0
  %v580 = vadd.f32 0.0, %v579
  %v581 = vpop.f32.mrf.mxu0
  %582 = vmatprep.mubr.bf16.mxu0 0
  %583 = vmatmul.mubr.bf16.gmra.mxu0 %v368
  %v584 = vpop.f32.mrf.mxu0
  %v585 = vadd.f32 0.0, %v584
  %v586 = vpop.f32.mrf.mxu0
  %v587 = vpop.f32.mrf.mxu0
  %v588 = vadd.f32 0.0, %v587
  %v589 = vpop.f32.mrf.mxu0
  %590 = vmatprep.mubr.bf16.mxu0 0
  %591 = vmatmul.mubr.bf16.gmra.mxu0 %v369
  %v592 = vpop.f32.mrf.mxu0
  %v593 = vadd.f32 0.0, %v592
  %v594 = vpop.f32.mrf.mxu0
  %v595 = vpop.f32.mrf.mxu0
  %v596 = vadd.f32 0.0, %v595
  %v597 = vpop.f32.mrf.mxu0
  %598 = vmatprep.mubr.bf16.mxu0 0
  %599 = vmatmul.mubr.bf16.gmra.mxu0 %v370
  %v600 = vpop.f32.mrf.mxu0
  %v601 = vadd.f32 0.0, %v600
  %v602 = vpop.f32.mrf.mxu0
  %v603 = vpop.f32.mrf.mxu0
  %v604 = vadd.f32 0.0, %v603
  %v605 = vpop.f32.mrf.mxu0
  %606 = vmatprep.mubr.bf16.mxu0 0
  %607 = vmatmul.mubr.bf16.gmra.mxu0 %v371
  %v608 = vpop.f32.mrf.mxu0
  %v609 = vadd.f32 0.0, %v608
  %v610 = vpop.f32.mrf.mxu0
  %v611 = vpop.f32.mrf.mxu0
  %v612 = vadd.f32 0.0, %v611
  %v613 = vpop.f32.mrf.mxu0
  %614 = vmatprep.mubr.bf16.mxu0 0
  %615 = vmatmul.mubr.bf16.gmra.mxu0 %v372
  %v616 = vpop.f32.mrf.mxu0
  %v617 = vadd.f32 0.0, %v616
  %v618 = vpop.f32.mrf.mxu0
  %v619 = vpop.f32.mrf.mxu0
  %v620 = vadd.f32 0.0, %v619
  %v621 = vpop.f32.mrf.mxu0
  %622 = vmatprep.mubr.bf16.mxu0 0
  %623 = vmatmul.mubr.bf16.gmra.mxu0 %v373
  %v624 = vpop.f32.mrf.mxu0
  %v625 = vadd.f32 0.0, %v624
  %v626 = vpop.f32.mrf.mxu0
  %v627 = vpop.f32.mrf.mxu0
  %v628 = vadd.f32 0.0, %v627
  %v629 = vpop.f32.mrf.mxu0
  %630 = vmatprep.mubr.bf16.mxu0 0
  %631 = vmatmul.mubr.bf16.gmra.mxu0 %v374
  %v632 = vpop.f32.mrf.mxu0
  %v633 = vadd.f32 0.0, %v632
  %v634 = vpop.f32.mrf.mxu0
  %v635 = vpop.f32.mrf.mxu0
  %v636 = vadd.f32 0.0, %v635
  %v637 = vpop.f32.mrf.mxu0
  %638 = vmatprep.mubr.bf16.mxu0 0
  %639 = vmatmul.mubr.bf16.gmra.mxu0 %v375
  %v640 = vpop.f32.mrf.mxu0
  %v641 = vadd.f32 0.0, %v640
  %v642 = vpop.f32.mrf.mxu0
  %v643 = vpop.f32.mrf.mxu0
  %v644 = vadd.f32 0.0, %v643
  %v645 = vpop.f32.mrf.mxu0
  %646 = vmatprep.mubr.bf16.mxu0 0
  %647 = vmatmul.mubr.bf16.gmra.mxu0 %v376
  %v648 = vpop.f32.mrf.mxu0
  %v649 = vadd.f32 0.0, %v648
  %v650 = vpop.f32.mrf.mxu0
  %v651 = vpop.f32.mrf.mxu0
  %v652 = vadd.f32 0.0, %v651
  %v653 = vpop.f32.mrf.mxu0
  %654 = vmatprep.mubr.bf16.mxu0 0
  %655 = vmatmul.mubr.bf16.gmra.mxu0 %v377
  %v656 = vpop.f32.mrf.mxu0
  %v657 = vadd.f32 0.0, %v656
  %v658 = vpop.f32.mrf.mxu0
  %v659 = vpop.f32.mrf.mxu0
  %v660 = vadd.f32 0.0, %v659
  %v661 = vpop.f32.mrf.mxu0
  %662 = vmatprep.mubr.bf16.mxu0 0
  %663 = vmatmul.mubr.bf16.gmra.mxu0 %v378
  %v664 = vpop.f32.mrf.mxu0
  %v665 = vadd.f32 0.0, %v664
  %v666 = vpop.f32.mrf.mxu0
  %v667 = vpop.f32.mrf.mxu0
  %v668 = vadd.f32 0.0, %v667
  %v669 = vpop.f32.mrf.mxu0
  %670 = vmatprep.mubr.bf16.mxu0 0
  %671 = vmatmul.mubr.bf16.gmra.mxu0 %v379
  %v672 = vpop.f32.mrf.mxu0
  %v673 = vadd.f32 0.0, %v672
  %v674 = vpop.f32.mrf.mxu0
  %v675 = vpop.f32.mrf.mxu0
  %v676 = vadd.f32 0.0, %v675
  %v677 = vpop.f32.mrf.mxu0
  %678 = vmatprep.mubr.bf16.mxu0 0
  %679 = vmatmul.mubr.bf16.gmra.mxu0 %v380
  %v680 = vpop.f32.mrf.mxu0
  %v681 = vadd.f32 0.0, %v680
  %v682 = vpop.f32.mrf.mxu0
  %v683 = vpop.f32.mrf.mxu0
  %v684 = vadd.f32 0.0, %v683
  %v685 = vpop.f32.mrf.mxu0
  %686 = vmatprep.mubr.bf16.mxu0 0
  %687 = vmatmul.mubr.bf16.gmra.mxu0 %v381
  %v688 = vpop.f32.mrf.mxu0
  %v689 = vadd.f32 0.0, %v688
  %v690 = vpop.f32.mrf.mxu0
  %v691 = vpop.f32.mrf.mxu0
  %v692 = vadd.f32 0.0, %v691
  %v693 = vpop.f32.mrf.mxu0
  %694 = vmatprep.mubr.bf16.mxu0 0
  %695 = vmatmul.mubr.bf16.gmra.mxu0 %v382
  %v696 = vpop.f32.mrf.mxu0
  %v697 = vadd.f32 0.0, %v696
  %v698 = vpop.f32.mrf.mxu0
  %v699 = vpop.f32.mrf.mxu0
  %v700 = vadd.f32 0.0, %v699
  %v701 = vpop.f32.mrf.mxu0
  %702 = vmatprep.mubr.bf16.mxu0 0
  %703 = vmatmul.mubr.bf16.gmra.mxu0 %v383
  %v704 = vpop.f32.mrf.mxu0
  %v705 = vadd.f32 0.0, %v704
  %v706 = vpop.f32.mrf.mxu0
  %v707 = vpop.f32.mrf.mxu0
  %v708 = vadd.f32 0.0, %v707
  %v709 = vpop.f32.mrf.mxu0
  %710 = vmatprep.mubr.bf16.mxu0 0
  %711 = vmatmul.mubr.bf16.gmra.mxu0 %v384
  %v712 = vpop.f32.mrf.mxu0
  %v713 = vadd.f32 0.0, %v712
  %v714 = vpop.f32.mrf.mxu0
  %v715 = vpop.f32.mrf.mxu0
  %v716 = vadd.f32 0.0, %v715
  %v717 = vpop.f32.mrf.mxu0
  %718 = vmatprep.mubr.bf16.mxu0 0
  %719 = vmatmul.mubr.bf16.gmra.mxu0 %v385
  %v720 = vpop.f32.mrf.mxu0
  %v721 = vadd.f32 0.0, %v720
  %v722 = vpop.f32.mrf.mxu0
  %v723 = vpop.f32.mrf.mxu0
  %v724 = vadd.f32 0.0, %v723
  %v725 = vpop.f32.mrf.mxu0
  %726 = vmatprep.mubr.bf16.mxu0 0
  %727 = vmatmul.mubr.bf16.gmra.mxu0 %v386
  %v728 = vpop.f32.mrf.mxu0
  %v729 = vadd.f32 0.0, %v728
  %v730 = vpop.f32.mrf.mxu0
  %v731 = vpop.f32.mrf.mxu0
  %v732 = vadd.f32 0.0, %v731
  %v733 = vpop.f32.mrf.mxu0
  %734 = vmatprep.mubr.bf16.mxu0 0
  %735 = vmatmul.mubr.bf16.gmra.mxu0 %v387
  %v736 = vpop.f32.mrf.mxu0
  %v737 = vadd.f32 0.0, %v736
  %v738 = vpop.f32.mrf.mxu0
  %v739 = vpop.f32.mrf.mxu0
  %v740 = vadd.f32 0.0, %v739
  %v741 = vpop.f32.mrf.mxu0
  %742 = vmatprep.mubr.bf16.mxu0 0
  %743 = vmatmul.mubr.bf16.gmra.mxu0 %v388
  %v744 = vpop.f32.mrf.mxu0
  %v745 = vadd.f32 0.0, %v744
  %v746 = vpop.f32.mrf.mxu0
  %v747 = vpop.f32.mrf.mxu0
  %v748 = vadd.f32 0.0, %v747
  %v749 = vpop.f32.mrf.mxu0
  %750 = vmatprep.mubr.bf16.mxu0 0
  %751 = vmatmul.mubr.bf16.gmra.mxu0 %v389
  %v752 = vpop.f32.mrf.mxu0
  %v753 = vadd.f32 0.0, %v752
  %v754 = vpop.f32.mrf.mxu0
  %v755 = vpop.f32.mrf.mxu0
  %v756 = vadd.f32 0.0, %v755
  %v757 = vpop.f32.mrf.mxu0
  %758 = vdwg.mxu0
  %v759 = vadd.f32 %v86, %v505
  %v760 = vadd.f32 %v87, %v508
  %v761 = vadd.f32 %v88, %v513
  %v762 = vadd.f32 %v89, %v516
  %v763 = vadd.f32 %v90, %v521
  %v764 = vadd.f32 %v91, %v524
  %v765 = vadd.f32 %v92, %v529
  %v766 = vadd.f32 %v93, %v532
  %v767 = vadd.f32 %v94, %v537
  %v768 = vadd.f32 %v95, %v540
  %v769 = vadd.f32 %v96, %v545
  %v770 = vadd.f32 %v97, %v548
  %v771 = vadd.f32 %v98, %v553
  %v772 = vadd.f32 %v99, %v556
  %v773 = vadd.f32 %v100, %v561
  %v774 = vadd.f32 %v101, %v564
  %v775 = vadd.f32 %v102, %v569
  %v776 = vadd.f32 %v103, %v572
  %v777 = vadd.f32 %v104, %v577
  %v778 = vadd.f32 %v105, %v580
  %v779 = vadd.f32 %v106, %v585
  %v780 = vadd.f32 %v107, %v588
  %v781 = vadd.f32 %v108, %v593
  %v782 = vadd.f32 %v109, %v596
  %v783 = vadd.f32 %v110, %v601
  %v784 = vadd.f32 %v111, %v604
  %v785 = vadd.f32 %v112, %v609
  %v786 = vadd.f32 %v113, %v612
  %v787 = vadd.f32 %v114, %v617
  %v788 = vadd.f32 %v115, %v620
  %v789 = vadd.f32 %v116, %v625
  %v790 = vadd.f32 %v117, %v628
  %v791 = vadd.f32 %v118, %v633
  %v792 = vadd.f32 %v119, %v636
  %v793 = vadd.f32 %v120, %v641
  %v794 = vadd.f32 %v121, %v644
  %v795 = vadd.f32 %v122, %v649
  %v796 = vadd.f32 %v123, %v652
  %v797 = vadd.f32 %v124, %v657
  %v798 = vadd.f32 %v125, %v660
  %v799 = vadd.f32 %v126, %v665
  %v800 = vadd.f32 %v127, %v668
  %v801 = vadd.f32 %v128, %v673
  %v802 = vadd.f32 %v129, %v676
  %v803 = vadd.f32 %v130, %v681
  %v804 = vadd.f32 %v131, %v684
  %v805 = vadd.f32 %v132, %v689
  %v806 = vadd.f32 %v133, %v692
  %v807 = vadd.f32 %v134, %v697
  %v808 = vadd.f32 %v135, %v700
  %v809 = vadd.f32 %v136, %v705
  %v810 = vadd.f32 %v137, %v708
  %v811 = vadd.f32 %v138, %v713
  %v812 = vadd.f32 %v139, %v716
  %v813 = vadd.f32 %v140, %v721
  %v814 = vadd.f32 %v141, %v724
  %v815 = vadd.f32 %v142, %v729
  %v816 = vadd.f32 %v143, %v732
  %v817 = vadd.f32 %v144, %v737
  %v818 = vadd.f32 %v145, %v740
  %v819 = vadd.f32 %v146, %v745
  %v820 = vadd.f32 %v147, %v748
  %v821 = vadd.f32 %v148, %v753
  %v822 = vadd.f32 %v149, %v756
  %823 = vst [vmem:[#allocation2] sm:$0xff] %v759
  %824 = vst [vmem:[#allocation2 + $0x8] sm:$0xff] %v760
  %825 = vst [vmem:[#allocation2 + $0x10] sm:$0xff] %v761
  %826 = vst [vmem:[#allocation2 + $0x18] sm:$0xff] %v762
  %827 = vst [vmem:[#allocation2 + $0x20] sm:$0xff] %v763
  %828 = vst [vmem:[#allocation2 + $0x28] sm:$0xff] %v764
  %829 = vst [vmem:[#allocation2 + $0x30] sm:$0xff] %v765
  %830 = vst [vmem:[#allocation2 + $0x38] sm:$0xff] %v766
  %831 = vst [vmem:[#allocation2 + $0x40] sm:$0xff] %v767
  %832 = vst [vmem:[#allocation2 + $0x48] sm:$0xff] %v768
  %833 = vst [vmem:[#allocation2 + $0x50] sm:$0xff] %v769
  %834 = vst [vmem:[#allocation2 + $0x58] sm:$0xff] %v770
  %835 = vst [vmem:[#allocation2 + $0x60] sm:$0xff] %v771
  %836 = vst [vmem:[#allocation2 + $0x68] sm:$0xff] %v772
  %837 = vst [vmem:[#allocation2 + $0x70] sm:$0xff] %v773
  %838 = vst [vmem:[#allocation2 + $0x78] sm:$0xff] %v774
  %839 = vst [vmem:[#allocation2 + $0x80] sm:$0xff] %v775
  %840 = vst [vmem:[#allocation2 + $0x88] sm:$0xff] %v776
  %841 = vst [vmem:[#allocation2 + $0x90] sm:$0xff] %v777
  %842 = vst [vmem:[#allocation2 + $0x98] sm:$0xff] %v778
  %843 = vst [vmem:[#allocation2 + $0xa0] sm:$0xff] %v779
  %844 = vst [vmem:[#allocation2 + $0xa8] sm:$0xff] %v780
  %845 = vst [vmem:[#allocation2 + $0xb0] sm:$0xff] %v781
  %846 = vst [vmem:[#allocation2 + $0xb8] sm:$0xff] %v782
  %847 = vst [vmem:[#allocation2 + $0xc0] sm:$0xff] %v783
  %848 = vst [vmem:[#allocation2 + $0xc8] sm:$0xff] %v784
  %849 = vst [vmem:[#allocation2 + $0xd0] sm:$0xff] %v785
  %850 = vst [vmem:[#allocation2 + $0xd8] sm:$0xff] %v786
  %851 = vst [vmem:[#allocation2 + $0xe0] sm:$0xff] %v787
  %852 = vst [vmem:[#allocation2 + $0xe8] sm:$0xff] %v788
  %853 = vst [vmem:[#allocation2 + $0xf0] sm:$0xff] %v789
  %854 = vst [vmem:[#allocation2 + $0xf8] sm:$0xff] %v790
  %855 = vst [vmem:[#allocation2 + $0x100] sm:$0xff] %v791
  %856 = vst [vmem:[#allocation2 + $0x108] sm:$0xff] %v792
  %857 = vst [vmem:[#allocation2 + $0x110] sm:$0xff] %v793
  %858 = vst [vmem:[#allocation2 + $0x118] sm:$0xff] %v794
  %859 = vst [vmem:[#allocation2 + $0x120] sm:$0xff] %v795
  %860 = vst [vmem:[#allocation2 + $0x128] sm:$0xff] %v796
  %861 = vst [vmem:[#allocation2 + $0x130] sm:$0xff] %v797
  %862 = vst [vmem:[#allocation2 + $0x138] sm:$0xff] %v798
  %863 = vst [vmem:[#allocation2 + $0x140] sm:$0xff] %v799
  %864 = vst [vmem:[#allocation2 + $0x148] sm:$0xff] %v800
  %865 = vst [vmem:[#allocation2 + $0x150] sm:$0xff] %v801
  %866 = vst [vmem:[#allocation2 + $0x158] sm:$0xff] %v802
  %867 = vst [vmem:[#allocation2 + $0x160] sm:$0xff] %v803
  %868 = vst [vmem:[#allocation2 + $0x168] sm:$0xff] %v804
  %869 = vst [vmem:[#allocation2 + $0x170] sm:$0xff] %v805
  %870 = vst [vmem:[#allocation2 + $0x178] sm:$0xff] %v806
  %871 = vst [vmem:[#allocation2 + $0x180] sm:$0xff] %v807
  %872 = vst [vmem:[#allocation2 + $0x188] sm:$0xff] %v808
  %873 = vst [vmem:[#allocation2 + $0x190] sm:$0xff] %v809
  %874 = vst [vmem:[#allocation2 + $0x198] sm:$0xff] %v810
  %875 = vst [vmem:[#allocation2 + $0x1a0] sm:$0xff] %v811
  %876 = vst [vmem:[#allocation2 + $0x1a8] sm:$0xff] %v812
  %877 = vst [vmem:[#allocation2 + $0x1b0] sm:$0xff] %v813
  %878 = vst [vmem:[#allocation2 + $0x1b8] sm:$0xff] %v814
  %879 = vst [vmem:[#allocation2 + $0x1c0] sm:$0xff] %v815
  %880 = vst [vmem:[#allocation2 + $0x1c8] sm:$0xff] %v816
  %881 = vst [vmem:[#allocation2 + $0x1d0] sm:$0xff] %v817
  %882 = vst [vmem:[#allocation2 + $0x1d8] sm:$0xff] %v818
  %883 = vst [vmem:[#allocation2 + $0x1e0] sm:$0xff] %v819
  %884 = vst [vmem:[#allocation2 + $0x1e8] sm:$0xff] %v820
  %885 = vst [vmem:[#allocation2 + $0x1f0] sm:$0xff] %v821
  %886 = vst [vmem:[#allocation2 + $0x1f8] sm:$0xff] %v822
  // Predicated region
  $region22: #{fused_gemm.1} parent=0 // pred_check
    %p887 = pneg %p18
  $region23: #{fused_gemm.1} parent=0 // pred_check_branch
    %889 = sbr.rel (%p887) target = $region25
  $region24: #{fused_gemm.1} parent=0 // pred_region
    %v890 = vld [vmem:[#allocation2] sm:$0xff]
    %v891 = vld [vmem:[#allocation2 + $0x8] sm:$0xff]
    %v892 = vld [vmem:[#allocation2 + $0x10] sm:$0xff]
    %v893 = vld [vmem:[#allocation2 + $0x18] sm:$0xff]
    %v894 = vld [vmem:[#allocation2 + $0x20] sm:$0xff]
    %v895 = vld [vmem:[#allocation2 + $0x28] sm:$0xff]
    %v896 = vld [vmem:[#allocation2 + $0x30] sm:$0xff]
    %v897 = vld [vmem:[#allocation2 + $0x38] sm:$0xff]
    %v898 = vld [vmem:[#allocation2 + $0x40] sm:$0xff]
    %v899 = vld [vmem:[#allocation2 + $0x48] sm:$0xff]
    %v900 = vld [vmem:[#allocation2 + $0x50] sm:$0xff]
    %v901 = vld [vmem:[#allocation2 + $0x58] sm:$0xff]
    %v902 = vld [vmem:[#allocation2 + $0x60] sm:$0xff]
    %v903 = vld [vmem:[#allocation2 + $0x68] sm:$0xff]
    %v904 = vld [vmem:[#allocation2 + $0x70] sm:$0xff]
    %v905 = vld [vmem:[#allocation2 + $0x78] sm:$0xff]
    %v906 = vld [vmem:[#allocation2 + $0x80] sm:$0xff]
    %v907 = vld [vmem:[#allocation2 + $0x88] sm:$0xff]
    %v908 = vld [vmem:[#allocation2 + $0x90] sm:$0xff]
    %v909 = vld [vmem:[#allocation2 + $0x98] sm:$0xff]
    %v910 = vld [vmem:[#allocation2 + $0xa0] sm:$0xff]
    %v911 = vld [vmem:[#allocation2 + $0xa8] sm:$0xff]
    %v912 = vld [vmem:[#allocation2 + $0xb0] sm:$0xff]
    %v913 = vld [vmem:[#allocation2 + $0xb8] sm:$0xff]
    %v914 = vld [vmem:[#allocation2 + $0xc0] sm:$0xff]
    %v915 = vld [vmem:[#allocation2 + $0xc8] sm:$0xff]
    %v916 = vld [vmem:[#allocation2 + $0xd0] sm:$0xff]
    %v917 = vld [vmem:[#allocation2 + $0xd8] sm:$0xff]
    %v918 = vld [vmem:[#allocation2 + $0xe0] sm:$0xff]
    %v919 = vld [vmem:[#allocation2 + $0xe8] sm:$0xff]
    %v920 = vld [vmem:[#allocation2 + $0xf0] sm:$0xff]
    %v921 = vld [vmem:[#allocation2 + $0xf8] sm:$0xff]
    %v922 = vld [vmem:[#allocation2 + $0x100] sm:$0xff]
    %v923 = vld [vmem:[#allocation2 + $0x108] sm:$0xff]
    %v924 = vld [vmem:[#allocation2 + $0x110] sm:$0xff]
    %v925 = vld [vmem:[#allocation2 + $0x118] sm:$0xff]
    %v926 = vld [vmem:[#allocation2 + $0x120] sm:$0xff]
    %v927 = vld [vmem:[#allocation2 + $0x128] sm:$0xff]
    %v928 = vld [vmem:[#allocation2 + $0x130] sm:$0xff]
    %v929 = vld [vmem:[#allocation2 + $0x138] sm:$0xff]
    %v930 = vld [vmem:[#allocation2 + $0x140] sm:$0xff]
    %v931 = vld [vmem:[#allocation2 + $0x148] sm:$0xff]
    %v932 = vld [vmem:[#allocation2 + $0x150] sm:$0xff]
    %v933 = vld [vmem:[#allocation2 + $0x158] sm:$0xff]
    %v934 = vld [vmem:[#allocation2 + $0x160] sm:$0xff]
    %v935 = vld [vmem:[#allocation2 + $0x168] sm:$0xff]
    %v936 = vld [vmem:[#allocation2 + $0x170] sm:$0xff]
    %v937 = vld [vmem:[#allocation2 + $0x178] sm:$0xff]
    %v938 = vld [vmem:[#allocation2 + $0x180] sm:$0xff]
    %v939 = vld [vmem:[#allocation2 + $0x188] sm:$0xff]
    %v940 = vld [vmem:[#allocation2 + $0x190] sm:$0xff]
    %v941 = vld [vmem:[#allocation2 + $0x198] sm:$0xff]
    %v942 = vld [vmem:[#allocation2 + $0x1a0] sm:$0xff]
    %v943 = vld [vmem:[#allocation2 + $0x1a8] sm:$0xff]
    %v944 = vld [vmem:[#allocation2 + $0x1b0] sm:$0xff]
    %v945 = vld [vmem:[#allocation2 + $0x1b8] sm:$0xff]
    %v946 = vld [vmem:[#allocation2 + $0x1c0] sm:$0xff]
    %v947 = vld [vmem:[#allocation2 + $0x1c8] sm:$0xff]
    %v948 = vld [vmem:[#allocation2 + $0x1d0] sm:$0xff]
    %v949 = vld [vmem:[#allocation2 + $0x1d8] sm:$0xff]
    %v950 = vld [vmem:[#allocation2 + $0x1e0] sm:$0xff]
    %v951 = vld [vmem:[#allocation2 + $0x1e8] sm:$0xff]
    %v952 = vld [vmem:[#allocation2 + $0x1f0] sm:$0xff]
    %v953 = vld [vmem:[#allocation2 + $0x1f8] sm:$0xff]
    %v954 = vld [vmem:[%s2] sm:$0x1]
    %v956 = vlaneseq
    %v957 = vshrl.u32 %v956, 7
    %v958 = vsub.s32 0, %v957
    %v959 = vrot.slane %v954, %v958
    %v961 = vmul.f32 %v890, %v959
    %v962 = vmul.f32 %v891, %v959
    %v963 = vmul.f32 %v892, %v959
    %v964 = vmul.f32 %v893, %v959
    %v965 = vmul.f32 %v894, %v959
    %v966 = vmul.f32 %v895, %v959
    %v967 = vmul.f32 %v896, %v959
    %v968 = vmul.f32 %v897, %v959
    %v969 = vmul.f32 %v898, %v959
    %v970 = vmul.f32 %v899, %v959
    %v971 = vmul.f32 %v900, %v959
    %v972 = vmul.f32 %v901, %v959
    %v973 = vmul.f32 %v902, %v959
    %v974 = vmul.f32 %v903, %v959
    %v975 = vmul.f32 %v904, %v959
    %v976 = vmul.f32 %v905, %v959
    %v977 = vmul.f32 %v906, %v959
    %v978 = vmul.f32 %v907, %v959
    %v979 = vmul.f32 %v908, %v959
    %v980 = vmul.f32 %v909, %v959
    %v981 = vmul.f32 %v910, %v959
    %v982 = vmul.f32 %v911, %v959
    %v983 = vmul.f32 %v912, %v959
    %v984 = vmul.f32 %v913, %v959
    %v985 = vmul.f32 %v914, %v959
    %v986 = vmul.f32 %v915, %v959
    %v987 = vmul.f32 %v916, %v959
    %v988 = vmul.f32 %v917, %v959
    %v989 = vmul.f32 %v918, %v959
    %v990 = vmul.f32 %v919, %v959
    %v991 = vmul.f32 %v920, %v959
    %v992 = vmul.f32 %v921, %v959
    %v993 = vmul.f32 %v922, %v959
    %v994 = vmul.f32 %v923, %v959
    %v995 = vmul.f32 %v924, %v959
    %v996 = vmul.f32 %v925, %v959
    %v997 = vmul.f32 %v926, %v959
    %v998 = vmul.f32 %v927, %v959
    %v999 = vmul.f32 %v928, %v959
    %v1000 = vmul.f32 %v929, %v959
    %v1001 = vmul.f32 %v930, %v959
    %v1002 = vmul.f32 %v931, %v959
    %v1003 = vmul.f32 %v932, %v959
    %v1004 = vmul.f32 %v933, %v959
    %v1005 = vmul.f32 %v934, %v959
    %v1006 = vmul.f32 %v935, %v959
    %v1007 = vmul.f32 %v936, %v959
    %v1008 = vmul.f32 %v937, %v959
    %v1009 = vmul.f32 %v938, %v959
    %v1010 = vmul.f32 %v939, %v959
    %v1011 = vmul.f32 %v940, %v959
    %v1012 = vmul.f32 %v941, %v959
    %v1013 = vmul.f32 %v942, %v959
    %v1014 = vmul.f32 %v943, %v959
    %v1015 = vmul.f32 %v944, %v959
    %v1016 = vmul.f32 %v945, %v959
    %v1017 = vmul.f32 %v946, %v959
    %v1018 = vmul.f32 %v947, %v959
    %v1019 = vmul.f32 %v948, %v959
    %v1020 = vmul.f32 %v949, %v959
    %v1021 = vmul.f32 %v950, %v959
    %v1022 = vmul.f32 %v951, %v959
    %v1023 = vmul.f32 %v952, %v959
    %v1024 = vmul.f32 %v953, %v959
    %v1025 = vld [vmem:[%s3] sm:$0x1]
    %v1027 = vlaneseq
    %v1028 = vshrl.u32 %v1027, 7
    %v1029 = vsub.s32 0, %v1028
    %v1030 = vrot.slane %v1025, %v1029
    %v1032 = vadd.f32 %v961, %v1030
    %v1033 = vadd.f32 %v962, %v1030
    %v1034 = vadd.f32 %v963, %v1030
    %v1035 = vadd.f32 %v964, %v1030
    %v1036 = vadd.f32 %v965, %v1030
    %v1037 = vadd.f32 %v966, %v1030
    %v1038 = vadd.f32 %v967, %v1030
    %v1039 = vadd.f32 %v968, %v1030
    %v1040 = vadd.f32 %v969, %v1030
    %v1041 = vadd.f32 %v970, %v1030
    %v1042 = vadd.f32 %v971, %v1030
    %v1043 = vadd.f32 %v972, %v1030
    %v1044 = vadd.f32 %v973, %v1030
    %v1045 = vadd.f32 %v974, %v1030
    %v1046 = vadd.f32 %v975, %v1030
    %v1047 = vadd.f32 %v976, %v1030
    %v1048 = vadd.f32 %v977, %v1030
    %v1049 = vadd.f32 %v978, %v1030
    %v1050 = vadd.f32 %v979, %v1030
    %v1051 = vadd.f32 %v980, %v1030
    %v1052 = vadd.f32 %v981, %v1030
    %v1053 = vadd.f32 %v982, %v1030
    %v1054 = vadd.f32 %v983, %v1030
    %v1055 = vadd.f32 %v984, %v1030
    %v1056 = vadd.f32 %v985, %v1030
    %v1057 = vadd.f32 %v986, %v1030
    %v1058 = vadd.f32 %v987, %v1030
    %v1059 = vadd.f32 %v988, %v1030
    %v1060 = vadd.f32 %v989, %v1030
    %v1061 = vadd.f32 %v990, %v1030
    %v1062 = vadd.f32 %v991, %v1030
    %v1063 = vadd.f32 %v992, %v1030
    %v1064 = vadd.f32 %v993, %v1030
    %v1065 = vadd.f32 %v994, %v1030
    %v1066 = vadd.f32 %v995, %v1030
    %v1067 = vadd.f32 %v996, %v1030
    %v1068 = vadd.f32 %v997, %v1030
    %v1069 = vadd.f32 %v998, %v1030
    %v1070 = vadd.f32 %v999, %v1030
    %v1071 = vadd.f32 %v1000, %v1030
    %v1072 = vadd.f32 %v1001, %v1030
    %v1073 = vadd.f32 %v1002, %v1030
    %v1074 = vadd.f32 %v1003, %v1030
    %v1075 = vadd.f32 %v1004, %v1030
    %v1076 = vadd.f32 %v1005, %v1030
    %v1077 = vadd.f32 %v1006, %v1030
    %v1078 = vadd.f32 %v1007, %v1030
    %v1079 = vadd.f32 %v1008, %v1030
    %v1080 = vadd.f32 %v1009, %v1030
    %v1081 = vadd.f32 %v1010, %v1030
    %v1082 = vadd.f32 %v1011, %v1030
    %v1083 = vadd.f32 %v1012, %v1030
    %v1084 = vadd.f32 %v1013, %v1030
    %v1085 = vadd.f32 %v1014, %v1030
    %v1086 = vadd.f32 %v1015, %v1030
    %v1087 = vadd.f32 %v1016, %v1030
    %v1088 = vadd.f32 %v1017, %v1030
    %v1089 = vadd.f32 %v1018, %v1030
    %v1090 = vadd.f32 %v1019, %v1030
    %v1091 = vadd.f32 %v1020, %v1030
    %v1092 = vadd.f32 %v1021, %v1030
    %v1093 = vadd.f32 %v1022, %v1030
    %v1094 = vadd.f32 %v1023, %v1030
    %v1095 = vadd.f32 %v1024, %v1030
    %v1096 = vmax.f32 %v1032, 0.0
    %v1097 = vmax.f32 %v1033, 0.0
    %v1098 = vmax.f32 %v1034, 0.0
    %v1099 = vmax.f32 %v1035, 0.0
    %v1100 = vmax.f32 %v1036, 0.0
    %v1101 = vmax.f32 %v1037, 0.0
    %v1102 = vmax.f32 %v1038, 0.0
    %v1103 = vmax.f32 %v1039, 0.0
    %v1104 = vmax.f32 %v1040, 0.0
    %v1105 = vmax.f32 %v1041, 0.0
    %v1106 = vmax.f32 %v1042, 0.0
    %v1107 = vmax.f32 %v1043, 0.0
    %v1108 = vmax.f32 %v1044, 0.0
    %v1109 = vmax.f32 %v1045, 0.0
    %v1110 = vmax.f32 %v1046, 0.0
    %v1111 = vmax.f32 %v1047, 0.0
    %v1112 = vmax.f32 %v1048, 0.0
    %v1113 = vmax.f32 %v1049, 0.0
    %v1114 = vmax.f32 %v1050, 0.0
    %v1115 = vmax.f32 %v1051, 0.0
    %v1116 = vmax.f32 %v1052, 0.0
    %v1117 = vmax.f32 %v1053, 0.0
    %v1118 = vmax.f32 %v1054, 0.0
    %v1119 = vmax.f32 %v1055, 0.0
    %v1120 = vmax.f32 %v1056, 0.0
    %v1121 = vmax.f32 %v1057, 0.0
    %v1122 = vmax.f32 %v1058, 0.0
    %v1123 = vmax.f32 %v1059, 0.0
    %v1124 = vmax.f32 %v1060, 0.0
    %v1125 = vmax.f32 %v1061, 0.0
    %v1126 = vmax.f32 %v1062, 0.0
    %v1127 = vmax.f32 %v1063, 0.0
    %v1128 = vmax.f32 %v1064, 0.0
    %v1129 = vmax.f32 %v1065, 0.0
    %v1130 = vmax.f32 %v1066, 0.0
    %v1131 = vmax.f32 %v1067, 0.0
    %v1132 = vmax.f32 %v1068, 0.0
    %v1133 = vmax.f32 %v1069, 0.0
    %v1134 = vmax.f32 %v1070, 0.0
    %v1135 = vmax.f32 %v1071, 0.0
    %v1136 = vmax.f32 %v1072, 0.0
    %v1137 = vmax.f32 %v1073, 0.0
    %v1138 = vmax.f32 %v1074, 0.0
    %v1139 = vmax.f32 %v1075, 0.0
    %v1140 = vmax.f32 %v1076, 0.0
    %v1141 = vmax.f32 %v1077, 0.0
    %v1142 = vmax.f32 %v1078, 0.0
    %v1143 = vmax.f32 %v1079, 0.0
    %v1144 = vmax.f32 %v1080, 0.0
    %v1145 = vmax.f32 %v1081, 0.0
    %v1146 = vmax.f32 %v1082, 0.0
    %v1147 = vmax.f32 %v1083, 0.0
    %v1148 = vmax.f32 %v1084, 0.0
    %v1149 = vmax.f32 %v1085, 0.0
    %v1150 = vmax.f32 %v1086, 0.0
    %v1151 = vmax.f32 %v1087, 0.0
    %v1152 = vmax.f32 %v1088, 0.0
    %v1153 = vmax.f32 %v1089, 0.0
    %v1154 = vmax.f32 %v1090, 0.0
    %v1155 = vmax.f32 %v1091, 0.0
    %v1156 = vmax.f32 %v1092, 0.0
    %v1157 = vmax.f32 %v1093, 0.0
    %v1158 = vmax.f32 %v1094, 0.0
    %v1159 = vmax.f32 %v1095, 0.0
    %1160 = vst [vmem:[%s4] sm:$0xff] %v1096
    %1161 = vst [vmem:[%s4 + $0x8] sm:$0xff] %v1097
    %1162 = vst [vmem:[%s4 + $0x10] sm:$0xff] %v1098
    %1163 = vst [vmem:[%s4 + $0x18] sm:$0xff] %v1099
    %1164 = vst [vmem:[%s4 + $0x20] sm:$0xff] %v1100
    %1165 = vst [vmem:[%s4 + $0x28] sm:$0xff] %v1101
    %1166 = vst [vmem:[%s4 + $0x30] sm:$0xff] %v1102
    %1167 = vst [vmem:[%s4 + $0x38] sm:$0xff] %v1103
    %1168 = vst [vmem:[%s4 + $0x40] sm:$0xff] %v1104
    %1169 = vst [vmem:[%s4 + $0x48] sm:$0xff] %v1105
    %1170 = vst [vmem:[%s4 + $0x50] sm:$0xff] %v1106
    %1171 = vst [vmem:[%s4 + $0x58] sm:$0xff] %v1107
    %1172 = vst [vmem:[%s4 + $0x60] sm:$0xff] %v1108
    %1173 = vst [vmem:[%s4 + $0x68] sm:$0xff] %v1109
    %1174 = vst [vmem:[%s4 + $0x70] sm:$0xff] %v1110
    %1175 = vst [vmem:[%s4 + $0x78] sm:$0xff] %v1111
    %1176 = vst [vmem:[%s4 + $0x80] sm:$0xff] %v1112
    %1177 = vst [vmem:[%s4 + $0x88] sm:$0xff] %v1113
    %1178 = vst [vmem:[%s4 + $0x90] sm:$0xff] %v1114
    %1179 = vst [vmem:[%s4 + $0x98] sm:$0xff] %v1115
    %1180 = vst [vmem:[%s4 + $0xa0] sm:$0xff] %v1116
    %1181 = vst [vmem:[%s4 + $0xa8] sm:$0xff] %v1117
    %1182 = vst [vmem:[%s4 + $0xb0] sm:$0xff] %v1118
    %1183 = vst [vmem:[%s4 + $0xb8] sm:$0xff] %v1119
    %1184 = vst [vmem:[%s4 + $0xc0] sm:$0xff] %v1120
    %1185 = vst [vmem:[%s4 + $0xc8] sm:$0xff] %v1121
    %1186 = vst [vmem:[%s4 + $0xd0] sm:$0xff] %v1122
    %1187 = vst [vmem:[%s4 + $0xd8] sm:$0xff] %v1123
    %1188 = vst [vmem:[%s4 + $0xe0] sm:$0xff] %v1124
    %1189 = vst [vmem:[%s4 + $0xe8] sm:$0xff] %v1125
    %1190 = vst [vmem:[%s4 + $0xf0] sm:$0xff] %v1126
    %1191 = vst [vmem:[%s4 + $0xf8] sm:$0xff] %v1127
    %1192 = vst [vmem:[%s4 + $0x100] sm:$0xff] %v1128
    %1193 = vst [vmem:[%s4 + $0x108] sm:$0xff] %v1129
    %1194 = vst [vmem:[%s4 + $0x110] sm:$0xff] %v1130
    %1195 = vst [vmem:[%s4 + $0x118] sm:$0xff] %v1131
    %1196 = vst [vmem:[%s4 + $0x120] sm:$0xff] %v1132
    %1197 = vst [vmem:[%s4 + $0x128] sm:$0xff] %v1133
    %1198 = vst [vmem:[%s4 + $0x130] sm:$0xff] %v1134
    %1199 = vst [vmem:[%s4 + $0x138] sm:$0xff] %v1135
    %1200 = vst [vmem:[%s4 + $0x140] sm:$0xff] %v1136
    %1201 = vst [vmem:[%s4 + $0x148] sm:$0xff] %v1137
    %1202 = vst [vmem:[%s4 + $0x150] sm:$0xff] %v1138
    %1203 = vst [vmem:[%s4 + $0x158] sm:$0xff] %v1139
    %1204 = vst [vmem:[%s4 + $0x160] sm:$0xff] %v1140
    %1205 = vst [vmem:[%s4 + $0x168] sm:$0xff] %v1141
    %1206 = vst [vmem:[%s4 + $0x170] sm:$0xff] %v1142
    %1207 = vst [vmem:[%s4 + $0x178] sm:$0xff] %v1143
    %1208 = vst [vmem:[%s4 + $0x180] sm:$0xff] %v1144
    %1209 = vst [vmem:[%s4 + $0x188] sm:$0xff] %v1145
    %1210 = vst [vmem:[%s4 + $0x190] sm:$0xff] %v1146
    %1211 = vst [vmem:[%s4 + $0x198] sm:$0xff] %v1147
    %1212 = vst [vmem:[%s4 + $0x1a0] sm:$0xff] %v1148
    %1213 = vst [vmem:[%s4 + $0x1a8] sm:$0xff] %v1149
    %1214 = vst [vmem:[%s4 + $0x1b0] sm:$0xff] %v1150
    %1215 = vst [vmem:[%s4 + $0x1b8] sm:$0xff] %v1151
    %1216 = vst [vmem:[%s4 + $0x1c0] sm:$0xff] %v1152
    %1217 = vst [vmem:[%s4 + $0x1c8] sm:$0xff] %v1153
    %1218 = vst [vmem:[%s4 + $0x1d0] sm:$0xff] %v1154
    %1219 = vst [vmem:[%s4 + $0x1d8] sm:$0xff] %v1155
    %1220 = vst [vmem:[%s4 + $0x1e0] sm:$0xff] %v1156
    %1221 = vst [vmem:[%s4 + $0x1e8] sm:$0xff] %v1157
    %1222 = vst [vmem:[%s4 + $0x1f0] sm:$0xff] %v1158
    %1223 = vst [vmem:[%s4 + $0x1f8] sm:$0xff] %v1159
  $region25: #{fused_gemm.1} parent=0 // pred_fallthru
    _
  // Predicated region
  $region26: #{fused_gemm.1} parent=0 // pred_check
    _
  $region27: #{fused_gemm.1} parent=0 // pred_check_branch
    %1225 = sbr.rel (0) target = $region29
  $region28: #{fused_gemm.1} parent=0 // pred_region
    _
  $region29: #{fused_gemm.1} parent=0 // pred_fallthru
    _
  // Predicated region
  $region30: #{fused_gemm.1} parent=0 // pred_check
    _
  $region31: #{fused_gemm.1} parent=0 // pred_check_branch
    %1227 = sbr.rel (0) target = $region33
  $region32: #{fused_gemm.1} parent=0 // pred_region
    _
  $region33: #{fused_gemm.1} parent=0 // pred_fallthru
    _

</llo_original>
